<compile_context>
chip_gen: v7x
topology: tpu7x:2x2x1
jax: 0.10.0
libtpu: 0.0.40
codegen_flags: <defaults>
</compile_context>

<pallas_src>
import functools

import numpy as np
import jax
import jax.numpy as jnp
from jax.experimental import pallas as pl
from jax.experimental.pallas import tpu as pltpu

LN_EPS = 1e-5   # nn.LayerNorm default


# ----------------------- sincos position embedding (host-side, numpy) -----------------------
def get_1d_sincos_pos_embed_from_grid(embed_dim, pos):
    assert embed_dim % 2 == 0
    omega = np.arange(embed_dim // 2, dtype=float)
    omega /= embed_dim / 2.0
    omega = 1.0 / 10000 ** omega
    pos = pos.reshape(-1)
    out = np.einsum("m,d->md", pos, omega)
    return np.concatenate([np.sin(out), np.cos(out)], axis=1)


def get_2d_sincos_pos_embed_from_grid(embed_dim, grid):
    assert embed_dim % 2 == 0
    emb_h = get_1d_sincos_pos_embed_from_grid(embed_dim // 2, grid[0])
    emb_w = get_1d_sincos_pos_embed_from_grid(embed_dim // 2, grid[1])
    return np.concatenate([emb_h, emb_w], axis=1)


def get_2d_sincos_pos_embed(embed_dim, grid_size):
    grid_size = (grid_size, grid_size) if not isinstance(grid_size, tuple) else grid_size
    grid_h = np.arange(grid_size[0], dtype=np.float32)
    grid_w = np.arange(grid_size[1], dtype=np.float32)
    grid = np.meshgrid(grid_w, grid_h)
    grid = np.stack(grid, axis=0).reshape([2, 1, grid_size[0], grid_size[1]])
    return get_2d_sincos_pos_embed_from_grid(embed_dim, grid)


# --------------------------------------- kernel ----------------------------------------------
def _layernorm(x, g, b):
    # two-pass LayerNorm in f32 (avoids E[x^2] - mean^2 cancellation)
    mu = jnp.mean(x, axis=-1, keepdims=True)
    xc = x - mu
    var = jnp.mean(xc * xc, axis=-1, keepdims=True)
    return xc * jax.lax.rsqrt(var + LN_EPS) * g + b


def _encoder_kernel(p_ref, wpe_ref, posb_ref,
                    ln1g_ref, ln1b_ref, wqkv_ref, wo_ref, bo_ref,
                    ln2g_ref, ln2b_ref, w1_ref, b1_ref, w2_ref, b2_ref,
                    lnfg_ref, lnfb_ref,
                    out_ref, acc_ref, *, heads, dim_head, bt, n_tok):
    l = pl.program_id(1)
    n_layers = pl.num_programs(1)
    inner = heads * dim_head
    D = acc_ref.shape[-1]
    BtN = bt * n_tok
    bf = jnp.bfloat16

    # ---------- layer 0: patch embedding + sincos positional embedding ----------
    @pl.when(l == 0)
    def _():
        p2d = p_ref[...].astype(bf).reshape(BtN, p_ref.shape[-1])
        x0 = jnp.dot(p2d, wpe_ref[...], preferred_element_type=jnp.float32)       # (BtN, D)
        acc_ref[...] = x0.reshape(bt, n_tok, D) + posb_ref[...][None]             # + (pos + b)

    # f32 residual stream with the batch tile folded into the MXU row dimension
    x = acc_ref[...].reshape(BtN, D)

    # ---------- pre-norm multi-head self-attention ----------
    xn = _layernorm(x, ln1g_ref[...], ln1b_ref[...]).astype(bf)
    # one fused QKV projection (scale already folded into the q-columns host-side)
    qkv = jnp.dot(xn, wqkv_ref[...], preferred_element_type=jnp.float32).astype(bf)

    o_rows = []
    for b in range(bt):                                   # bt, heads are small static ints
        row = slice(b * n_tok, (b + 1) * n_tok)
        o_heads = []
        for h in range(heads):
            qs = qkv[row, h * dim_head:(h + 1) * dim_head]
            ks = qkv[row, inner + h * dim_head:inner + (h + 1) * dim_head]
            vs = qkv[row, 2 * inner + h * dim_head:2 * inner + (h + 1) * dim_head]
            # contract the feature axis of both operands: no explicit k.T / XLU transpose
            s = jax.lax.dot_general(qs, ks, (((1,), (1,)), ((), ())),
                                    preferred_element_type=jnp.float32)           # (N, N)
            s = s - jnp.max(s, axis=-1, keepdims=True)
            pexp = jnp.exp(s)
            inv = pl.reciprocal(jnp.sum(pexp, axis=-1, keepdims=True), approx=True)  # EUP
            o_heads.append(jnp.dot((pexp * inv).astype(bf), vs,
                                   preferred_element_type=jnp.float32))           # (N, dh)
        o_rows.append(jnp.concatenate(o_heads, axis=-1))                          # (N, inner)
    o = jnp.concatenate(o_rows, axis=0).astype(bf)                                # (BtN, inner)
    # single full-depth output projection (head-concat folded into the matmul)
    attn = jnp.dot(o, wo_ref[...], preferred_element_type=jnp.float32)
    x = x + attn + bo_ref[...]

    # ---------- pre-norm feed-forward: Linear -> Tanh -> Linear ----------
    xn2 = _layernorm(x, ln2g_ref[...], ln2b_ref[...]).astype(bf)
    h1 = jnp.tanh(jnp.dot(xn2, w1_ref[...], preferred_element_type=jnp.float32) + b1_ref[...])
    ff = jnp.dot(h1.astype(bf), w2_ref[...], preferred_element_type=jnp.float32) + b2_ref[...]
    x = x + ff

    acc_ref[...] = x.reshape(bt, n_tok, D)

    # ---------- last layer: final LayerNorm, write the kernel output ----------
    @pl.when(l == n_layers - 1)
    def _():
        xf = _layernorm(x, lnfg_ref[...], lnfb_ref[...])
        out_ref[...] = xf.reshape(bt, n_tok, D).astype(out_ref.dtype)


# ------------------------------ parameter preparation (once) ---------------------------------
def prepare_params(params, *, heads, dim_head):
    """bf16-materialize / stack / fuse weights once (NOT per forward call)."""
    bf, f32 = jnp.bfloat16, jnp.float32
    D = params["w_pe"].shape[1]
    Pd = params["w_pe"].shape[0]
    Pd_pad = ((Pd + 127) // 128) * 128
    scale = float(dim_head) ** -0.5

    layers = params["layers"]
    stack = lambda key, shape: jnp.stack([lp[key].reshape(shape) for lp in layers]).astype(f32)

    prep = {
        "pd_pad": Pd_pad,
        "w_pe": jnp.pad(params["w_pe"], ((0, Pd_pad - Pd), (0, 0))).astype(bf),
        # fold bias into the (resident) positional embedding
        "posb": (params["pos"] + params["b_pe"][None, :]).astype(f32),
        "lnf_g": params["lnf_g"].reshape(1, D).astype(f32),
        "lnf_b": params["lnf_b"].reshape(1, D).astype(f32),
        # per-layer weights stacked along a leading depth axis (streamed by the layer grid axis)
        "ln1_g": stack("ln1_g", (1, D)), "ln1_b": stack("ln1_b", (1, D)),
        "wqkv": jnp.stack([jnp.concatenate([lp["wq"] * scale, lp["wk"], lp["wv"]], axis=1)
                           for lp in layers]).astype(bf),
        "wo": jnp.stack([lp["wo"] for lp in layers]).astype(bf),
        "bo": stack("bo", (1, D)),
        "ln2_g": stack("ln2_g", (1, D)), "ln2_b": stack("ln2_b", (1, D)),
        "w1": jnp.stack([lp["w1"] for lp in layers]).astype(bf),
        "b1": stack("b1", (1, -1)),
        "w2": jnp.stack([lp["w2"] for lp in layers]).astype(bf),
        "b2": stack("b2", (1, D)),
    }
    return prep


# --------------------------------------- wrapper ---------------------------------------------
def encoder_vit_forward(img, prep, *, patch_size, heads, dim_head, batch_tile=None):
    """img: (B, C, H, W) f32.  Returns (B, dim, *, *) matching EncoderVIT.forward."""
    B, C, H, W = img.shape
    ph, pw = patch_size
    Hp, Wp = H // ph, W // pw
    N = Hp * Wp
    D = prep["w_pe"].shape[1]
    depth = prep["wqkv"].shape[0]
    inner = heads * dim_head
    M = prep["w1"].shape[2]
    Pd = C * ph * pw
    Pd_pad = prep["w_pe"].shape[0]

    Bt = batch_tile if batch_tile is not None else B   # fold all batches at small B
    assert B % Bt == 0

    # patchify (pure layout glue) + zero-pad the contraction dim to a lane-dense 128 multiple
    patches = img.reshape(B, C, Hp, ph, Wp, pw).transpose(0, 2, 4, 1, 3, 5)
    patches = patches.reshape(B, N, Pd)
    patches = jnp.pad(patches, ((0, 0), (0, 0), (0, Pd_pad - Pd)))

    batched = lambda shape: pl.BlockSpec((Bt,) + shape, lambda b, l: (b, 0, 0))
    resident = lambda shape: pl.BlockSpec(shape, lambda b, l: (0, 0))          # constant
    per_layer = lambda shape: pl.BlockSpec((None,) + shape, lambda b, l: (l, 0, 0))

    out = pl.pallas_call(
        functools.partial(_encoder_kernel, heads=heads, dim_head=dim_head, bt=Bt, n_tok=N),
        out_shape=jax.ShapeDtypeStruct((B, N, D), jnp.float32),
        grid_spec=pltpu.PrefetchScalarGridSpec(
            num_scalar_prefetch=0, grid=(B // Bt, depth),
            in_specs=[batched((N, Pd_pad)),                      # patches
                      resident((Pd_pad, D)), resident((N, D)),   # w_pe, pos+b
                      per_layer((1, D)), per_layer((1, D)),      # ln1
                      per_layer((D, 3 * inner)),                 # fused qkv
                      per_layer((inner, D)), per_layer((1, D)),  # to_out
                      per_layer((1, D)), per_layer((1, D)),      # ln2
                      per_layer((D, M)), per_layer((1, M)),      # ff1
                      per_layer((M, D)), per_layer((1, D)),      # ff2
                      resident((1, D)), resident((1, D))],       # final ln
            out_specs=batched((N, D)),
            scratch_shapes=[pltpu.VMEM((Bt, N, D), jnp.float32)]),
        compiler_params=pltpu.CompilerParams(
            dimension_semantics=("parallel", "arbitrary")),
    )(patches, prep["w_pe"], prep["posb"],
      prep["ln1_g"], prep["ln1_b"], prep["wqkv"], prep["wo"], prep["bo"],
      prep["ln2_g"], prep["ln2_b"], prep["w1"], prep["b1"], prep["w2"], prep["b2"],
      prep["lnf_g"], prep["lnf_b"])

    # reshape to NCHW exactly as the PyTorch module does (only spatially-square grids differ
    # from (B, Hp, Wp, D); we mirror the module's formula verbatim)
    x = out.reshape(B, N // Hp, N // Wp, D)
    return jnp.transpose(x, (0, 3, 1, 2))


# ------------------------------- pure-JAX reference ------------------------------------------
def _reference(img, params, *, patch_size, heads, dim_head):
    """Mirrors the kernel's mixed precision (bf16 matmul operands, f32 accumulation)."""
    B, C, H, W = img.shape
    ph, pw = patch_size
    Hp, Wp = H // ph, W // pw
    N = Hp * Wp
    D = params["w_pe"].shape[1]
    bf, f32 = jnp.bfloat16, jnp.float32
    scale = float(dim_head) ** -0.5

    def mm(a, w):
        return jnp.dot(a.astype(bf), w.astype(bf), preferred_element_type=f32)

    def ln(x, g, b):
        mu = jnp.mean(x, axis=-1, keepdims=True)
        xc = x - mu
        var = jnp.mean(xc * xc, axis=-1, keepdims=True)
        return xc * jax.lax.rsqrt(var + LN_EPS) * g + b

    patches = img.reshape(B, C, Hp, ph, Wp, pw).transpose(0, 2, 4, 1, 3, 5)
    patches = patches.reshape(B, N, C * ph * pw)
    x = mm(patches, params["w_pe"]) + params["b_pe"] + params["pos"]

    for lp in params["layers"]:
        xn = ln(x, lp["ln1_g"], lp["ln1_b"])
        q = mm(xn, lp["wq"] * scale)
        k = mm(xn, lp["wk"])
        v = mm(xn, lp["wv"])
        split = lambda t: t.reshape(B, N, heads, dim_head).transpose(0, 2, 1, 3)
        qh, kh, vh = split(q), split(k), split(v)
        s = jnp.einsum("bhnd,bhmd->bhnm", qh.astype(bf), kh.astype(bf),
                       preferred_element_type=f32)
        s = s - jnp.max(s, axis=-1, keepdims=True)
        p = jnp.exp(s)
        p = p / jnp.sum(p, axis=-1, keepdims=True)
        o = jnp.einsum("bhnm,bhmd->bhnd", p.astype(bf), vh.astype(bf),
                       preferred_element_type=f32)
        o = o.transpose(0, 2, 1, 3).reshape(B, N, heads * dim_head)
        x = x + mm(o, lp["wo"]) + lp["bo"]
        xn2 = ln(x, lp["ln2_g"], lp["ln2_b"])
        h1 = jnp.tanh(mm(xn2, lp["w1"]) + lp["b1"])
        x = x + mm(h1, lp["w2"]) + lp["b2"]

    x = ln(x, params["lnf_g"], params["lnf_b"])
    x = x.reshape(B, N // Hp, N // Wp, D)
    return jnp.transpose(x, (0, 3, 1, 2))


if __name__ == "__main__":
    B, C = 2, 3
    image_size, patch = 16, 4
    dim, depth, heads, dim_head, mlp_dim = 128, 2, 2, 64, 256
    Hp = Wp = image_size // patch
    N = Hp * Wp
    patch_dim = C * patch * patch
    inner = heads * dim_head

    key = jax.random.PRNGKey(0)
    keys = iter(jax.random.split(key, 64))

    def linear_w(k, fan_in, fan_out):
        return jax.random.normal(k, (fan_in, fan_out), jnp.float32) / float(np.sqrt(fan_in))

    params = {
        "w_pe": linear_w(next(keys), patch_dim, dim),
        "b_pe": jnp.zeros((dim,), jnp.float32),
        "pos": jnp.asarray(get_2d_sincos_pos_embed(dim, (Hp, Wp)), dtype=jnp.float32),
        "lnf_g": jnp.ones((dim,), jnp.float32),
        "lnf_b": jnp.zeros((dim,), jnp.float32),
        "layers": [],
    }
    for _ in range(depth):
        params["layers"].append({
            "ln1_g": jnp.ones((dim,), jnp.float32), "ln1_b": jnp.zeros((dim,), jnp.float32),
            "wq": linear_w(next(keys), dim, inner),
            "wk": linear_w(next(keys), dim, inner),
            "wv": linear_w(next(keys), dim, inner),
            "wo": linear_w(next(keys), inner, dim),
            "bo": 0.02 * jax.random.normal(next(keys), (dim,), jnp.float32),
            "ln2_g": jnp.ones((dim,), jnp.float32), "ln2_b": jnp.zeros((dim,), jnp.float32),
            "w1": linear_w(next(keys), dim, mlp_dim),
            "b1": 0.02 * jax.random.normal(next(keys), (mlp_dim,), jnp.float32),
            "w2": linear_w(next(keys), mlp_dim, dim),
            "b2": 0.02 * jax.random.normal(next(keys), (dim,), jnp.float32),
        })

    img = jax.random.normal(next(keys), (B, C, image_size, image_size), jnp.float32)

    # weights are bf16-materialized / fused / stacked ONCE, outside the jitted forward
    prep = prepare_params(params, heads=heads, dim_head=dim_head)

    fwd = jax.jit(functools.partial(encoder_vit_forward,
                                    patch_size=(patch, patch), heads=heads,
                                    dim_head=dim_head, batch_tile=B))
    out = jax.block_until_ready(fwd(img, prep))
    ref = jax.block_until_ready(
        _reference(img, params, patch_size=(patch, patch), heads=heads, dim_head=dim_head))

    assert out.shape == (B, dim, N // Hp, N // Wp) and out.dtype == jnp.float32
    max_err = float(jnp.max(jnp.abs(out - ref)))
    assert jnp.allclose(out, ref, atol=1e-2, rtol=1e-2), max_err
    print("KERNEL_OK")
</pallas_src>

<mosaic_0001>
module attributes {stable_mosaic.version = 11 : i64} {
  func.func @_encoder_kernel(%arg0: i32, %arg1: i32, %arg2: memref<2x16x128xf32, #tpu.memory_space<vmem>>, %arg3: memref<128x128xbf16, #tpu.memory_space<vmem>>, %arg4: memref<16x128xf32, #tpu.memory_space<vmem>>, %arg5: memref<1x1x128xf32, #tpu.memory_space<vmem>>, %arg6: memref<1x1x128xf32, #tpu.memory_space<vmem>>, %arg7: memref<1x128x384xbf16, #tpu.memory_space<vmem>>, %arg8: memref<1x128x128xbf16, #tpu.memory_space<vmem>>, %arg9: memref<1x1x128xf32, #tpu.memory_space<vmem>>, %arg10: memref<1x1x128xf32, #tpu.memory_space<vmem>>, %arg11: memref<1x1x128xf32, #tpu.memory_space<vmem>>, %arg12: memref<1x128x256xbf16, #tpu.memory_space<vmem>>, %arg13: memref<1x1x256xf32, #tpu.memory_space<vmem>>, %arg14: memref<1x256x128xbf16, #tpu.memory_space<vmem>>, %arg15: memref<1x1x128xf32, #tpu.memory_space<vmem>>, %arg16: memref<1x128xf32, #tpu.memory_space<vmem>>, %arg17: memref<1x128xf32, #tpu.memory_space<vmem>>, %arg18: memref<2x16x128xf32, #tpu.memory_space<vmem>>, %arg19: memref<2x16x128xf32, #tpu.memory_space<vmem>>) attributes {dimension_semantics = [#tpu.dimension_semantics<parallel>, #tpu.dimension_semantics<arbitrary>], iteration_bounds = array<i64: 1, 2>, scalar_prefetch = 0 : i64, scratch_operands = 1 : i64, tpu.core_type = #tpu.core_type<tc>, window_params = [{transform_indices = @transform_0, window_bounds = array<i64: 2, 16, 128>}, {pipeline_mode = #tpu.pipeline_mode<synchronous>, transform_indices = @transform_1, window_bounds = array<i64: 128, 128>}, {pipeline_mode = #tpu.pipeline_mode<synchronous>, transform_indices = @transform_2, window_bounds = array<i64: 16, 128>}, {transform_indices = @transform_3, window_bounds = array<i64: 1, 1, 128>}, {transform_indices = @transform_4, window_bounds = array<i64: 1, 1, 128>}, {transform_indices = @transform_5, window_bounds = array<i64: 1, 128, 384>}, {transform_indices = @transform_6, window_bounds = array<i64: 1, 128, 128>}, {transform_indices = @transform_7, window_bounds = array<i64: 1, 1, 128>}, {transform_indices = @transform_8, window_bounds = array<i64: 1, 1, 128>}, {transform_indices = @transform_9, window_bounds = array<i64: 1, 1, 128>}, {transform_indices = @transform_10, window_bounds = array<i64: 1, 128, 256>}, {transform_indices = @transform_11, window_bounds = array<i64: 1, 1, 256>}, {transform_indices = @transform_12, window_bounds = array<i64: 1, 256, 128>}, {transform_indices = @transform_13, window_bounds = array<i64: 1, 1, 128>}, {pipeline_mode = #tpu.pipeline_mode<synchronous>, transform_indices = @transform_14, window_bounds = array<i64: 1, 128>}, {pipeline_mode = #tpu.pipeline_mode<synchronous>, transform_indices = @transform_15, window_bounds = array<i64: 1, 128>}, {transform_indices = @transform_16, window_bounds = array<i64: 2, 16, 128>}]} {
    %c0_i32 = arith.constant 0 : i32
    %0 = arith.cmpi eq, %arg1, %c0_i32 : i32
    %1 = arith.extui %0 : i1 to i32
    %c0_i32_0 = arith.constant 0 : i32
    %2 = arith.cmpi ne, %1, %c0_i32_0 : i32
    scf.if %2 {
      %c0_69 = arith.constant 0 : index
      %c0_70 = arith.constant 0 : index
      %c0_71 = arith.constant 0 : index
      %157 = vector.load %arg2[%c0_69, %c0_70, %c0_71] : memref<2x16x128xf32, #tpu.memory_space<vmem>>, vector<2x16x128xf32>
      %158 = arith.truncf %157 : vector<2x16x128xf32> to vector<2x16x128xbf16>
      %159 = vector.shape_cast %158 : vector<2x16x128xbf16> to vector<32x128xbf16>
      %c0_72 = arith.constant 0 : index
      %c0_73 = arith.constant 0 : index
      %160 = vector.load %arg3[%c0_72, %c0_73] : memref<128x128xbf16, #tpu.memory_space<vmem>>, vector<128x128xbf16>
      %cst_74 = arith.constant dense<0.000000e+00> : vector<32x128xf32>
      %161 = tpu.matmul %159, %160, %cst_74 {dimension_numbers = #tpu.dot_dimension_numbers<[1], [0], [0], [1], [0, 0, 1, 1], [], []>} : vector<32x128xbf16>, vector<128x128xbf16>, vector<32x128xf32> -> vector<32x128xf32>
      %162 = vector.shape_cast %161 : vector<32x128xf32> to vector<2x16x128xf32>
      %c0_75 = arith.constant 0 : index
      %c0_76 = arith.constant 0 : index
      %163 = vector.load %arg4[%c0_75, %c0_76] : memref<16x128xf32, #tpu.memory_space<vmem>>, vector<16x128xf32>
      %164 = vector.shape_cast %163 : vector<16x128xf32> to vector<1x16x128xf32>
      %165 = vector.broadcast %164 : vector<1x16x128xf32> to vector<2x16x128xf32>
      %166 = arith.addf %162, %165 : vector<2x16x128xf32>
      %c0_77 = arith.constant 0 : index
      %c0_78 = arith.constant 0 : index
      %c0_79 = arith.constant 0 : index
      %167 = vector.load %arg19[%c0_77, %c0_78, %c0_79] : memref<2x16x128xf32, #tpu.memory_space<vmem>>, vector<2x16x128xf32>
      tpu.vector_store %arg19[%c0_77, %c0_78, %c0_79], %166 {strides = array<i32>} : memref<2x16x128xf32, #tpu.memory_space<vmem>>, vector<2x16x128xf32>,
    } else {
    }
    %c0 = arith.constant 0 : index
    %c0_1 = arith.constant 0 : index
    %c0_2 = arith.constant 0 : index
    %3 = vector.load %arg19[%c0, %c0_1, %c0_2] : memref<2x16x128xf32, #tpu.memory_space<vmem>>, vector<2x16x128xf32>
    %4 = vector.shape_cast %3 : vector<2x16x128xf32> to vector<32x128xf32>
    %c0_3 = arith.constant 0 : index
    %c0_4 = arith.constant 0 : index
    %c0_5 = arith.constant 0 : index
    %5 = vector.load %arg5[%c0_3, %c0_4, %c0_5] : memref<1x1x128xf32, #tpu.memory_space<vmem>>, vector<1x1x128xf32>
    %6 = vector.shape_cast %5 : vector<1x1x128xf32> to vector<1x128xf32>
    %c0_6 = arith.constant 0 : index
    %c0_7 = arith.constant 0 : index
    %c0_8 = arith.constant 0 : index
    %7 = vector.load %arg6[%c0_6, %c0_7, %c0_8] : memref<1x1x128xf32, #tpu.memory_space<vmem>>, vector<1x1x128xf32>
    %8 = vector.shape_cast %7 : vector<1x1x128xf32> to vector<1x128xf32>
    %cst = arith.constant dense<0.000000e+00> : vector<32xf32>
    %9 = vector.multi_reduction <add>, %4, %cst [1] : vector<32x128xf32> to vector<32xf32>
    %10 = vector.shape_cast %9 : vector<32xf32> to vector<32x1xf32>
    %cst_9 = arith.constant 1.280000e+02 : f32
    %11 = vector.broadcast %cst_9 : f32 to vector<32x1xf32>
    %12 = arith.divf %10, %11 : vector<32x1xf32>
    %13 = vector.broadcast %12 : vector<32x1xf32> to vector<32x128xf32>
    %14 = arith.subf %4, %13 : vector<32x128xf32>
    %15 = arith.mulf %14, %14 : vector<32x128xf32>
    %cst_10 = arith.constant dense<0.000000e+00> : vector<32xf32>
    %16 = vector.multi_reduction <add>, %15, %cst_10 [1] : vector<32x128xf32> to vector<32xf32>
    %17 = vector.shape_cast %16 : vector<32xf32> to vector<32x1xf32>
    %cst_11 = arith.constant 1.280000e+02 : f32
    %18 = vector.broadcast %cst_11 : f32 to vector<32x1xf32>
    %19 = arith.divf %17, %18 : vector<32x1xf32>
    %cst_12 = arith.constant 9.99999974E-6 : f32
    %20 = vector.broadcast %cst_12 : f32 to vector<32x1xf32>
    %21 = arith.addf %19, %20 : vector<32x1xf32>
    %22 = math.rsqrt %21 : vector<32x1xf32>
    %23 = vector.broadcast %22 : vector<32x1xf32> to vector<32x128xf32>
    %24 = arith.mulf %14, %23 : vector<32x128xf32>
    %25 = vector.broadcast %6 : vector<1x128xf32> to vector<32x128xf32>
    %26 = arith.mulf %24, %25 : vector<32x128xf32>
    %27 = vector.broadcast %8 : vector<1x128xf32> to vector<32x128xf32>
    %28 = arith.addf %26, %27 : vector<32x128xf32>
    %29 = arith.truncf %28 : vector<32x128xf32> to vector<32x128xbf16>
    %c0_13 = arith.constant 0 : index
    %c0_14 = arith.constant 0 : index
    %c0_15 = arith.constant 0 : index
    %30 = vector.load %arg7[%c0_13, %c0_14, %c0_15] : memref<1x128x384xbf16, #tpu.memory_space<vmem>>, vector<1x128x384xbf16>
    %31 = vector.shape_cast %30 : vector<1x128x384xbf16> to vector<128x384xbf16>
    %cst_16 = arith.constant dense<0.000000e+00> : vector<32x384xf32>
    %32 = tpu.matmul %29, %31, %cst_16 {dimension_numbers = #tpu.dot_dimension_numbers<[1], [0], [0], [1], [0, 0, 1, 1], [], []>} : vector<32x128xbf16>, vector<128x384xbf16>, vector<32x384xf32> -> vector<32x384xf32>
    %33 = arith.truncf %32 : vector<32x384xf32> to vector<32x384xbf16>
    %34 = vector.extract_strided_slice %33 {offsets = [0, 0], sizes = [16, 64], strides = [1, 1]} : vector<32x384xbf16> to vector<16x64xbf16>
    %35 = vector.extract_strided_slice %33 {offsets = [0, 128], sizes = [16, 64], strides = [1, 1]} : vector<32x384xbf16> to vector<16x64xbf16>
    %36 = vector.extract_strided_slice %33 {offsets = [0, 256], sizes = [16, 64], strides = [1, 1]} : vector<32x384xbf16> to vector<16x64xbf16>
    %cst_17 = arith.constant dense<0.000000e+00> : vector<16x16xf32>
    %37 = tpu.matmul %34, %35, %cst_17 {dimension_numbers = #tpu.dot_dimension_numbers<[1], [1], [0], [0], [0, 0, 1, 0], [], []>} : vector<16x64xbf16>, vector<16x64xbf16>, vector<16x16xf32> -> vector<16x16xf32>
    %cst_18 = arith.constant dense<0xFF800000> : vector<16xf32>
    %38 = vector.multi_reduction <maximumf>, %37, %cst_18 [1] : vector<16x16xf32> to vector<16xf32>
    %39 = vector.shape_cast %38 : vector<16xf32> to vector<16x1xf32>
    %40 = vector.broadcast %39 : vector<16x1xf32> to vector<16x16xf32>
    %41 = arith.subf %37, %40 : vector<16x16xf32>
    %42 = math.exp %41 : vector<16x16xf32>
    %cst_19 = arith.constant dense<0.000000e+00> : vector<16xf32>
    %43 = vector.multi_reduction <add>, %42, %cst_19 [1] : vector<16x16xf32> to vector<16xf32>
    %44 = vector.shape_cast %43 : vector<16xf32> to vector<16x1xf32>
    %45 = tpu.reciprocal %44 {approx = true} : vector<16x1xf32> -> vector<16x1xf32>
    %46 = vector.broadcast %45 : vector<16x1xf32> to vector<16x16xf32>
    %47 = arith.mulf %42, %46 : vector<16x16xf32>
    %48 = arith.truncf %47 : vector<16x16xf32> to vector<16x16xbf16>
    %cst_20 = arith.constant dense<0.000000e+00> : vector<16x64xf32>
    %49 = tpu.matmul %48, %36, %cst_20 {dimension_numbers = #tpu.dot_dimension_numbers<[1], [0], [0], [1], [0, 0, 1, 1], [], []>} : vector<16x16xbf16>, vector<16x64xbf16>, vector<16x64xf32> -> vector<16x64xf32>
    %50 = vector.extract_strided_slice %33 {offsets = [0, 64], sizes = [16, 64], strides = [1, 1]} : vector<32x384xbf16> to vector<16x64xbf16>
    %51 = vector.extract_strided_slice %33 {offsets = [0, 192], sizes = [16, 64], strides = [1, 1]} : vector<32x384xbf16> to vector<16x64xbf16>
    %52 = vector.extract_strided_slice %33 {offsets = [0, 320], sizes = [16, 64], strides = [1, 1]} : vector<32x384xbf16> to vector<16x64xbf16>
    %cst_21 = arith.constant dense<0.000000e+00> : vector<16x16xf32>
    %53 = tpu.matmul %50, %51, %cst_21 {dimension_numbers = #tpu.dot_dimension_numbers<[1], [1], [0], [0], [0, 0, 1, 0], [], []>} : vector<16x64xbf16>, vector<16x64xbf16>, vector<16x16xf32> -> vector<16x16xf32>
    %cst_22 = arith.constant dense<0xFF800000> : vector<16xf32>
    %54 = vector.multi_reduction <maximumf>, %53, %cst_22 [1] : vector<16x16xf32> to vector<16xf32>
    %55 = vector.shape_cast %54 : vector<16xf32> to vector<16x1xf32>
    %56 = vector.broadcast %55 : vector<16x1xf32> to vector<16x16xf32>
    %57 = arith.subf %53, %56 : vector<16x16xf32>
    %58 = math.exp %57 : vector<16x16xf32>
    %cst_23 = arith.constant dense<0.000000e+00> : vector<16xf32>
    %59 = vector.multi_reduction <add>, %58, %cst_23 [1] : vector<16x16xf32> to vector<16xf32>
    %60 = vector.shape_cast %59 : vector<16xf32> to vector<16x1xf32>
    %61 = tpu.reciprocal %60 {approx = true} : vector<16x1xf32> -> vector<16x1xf32>
    %62 = vector.broadcast %61 : vector<16x1xf32> to vector<16x16xf32>
    %63 = arith.mulf %58, %62 : vector<16x16xf32>
    %64 = arith.truncf %63 : vector<16x16xf32> to vector<16x16xbf16>
    %cst_24 = arith.constant dense<0.000000e+00> : vector<16x64xf32>
    %65 = tpu.matmul %64, %52, %cst_24 {dimension_numbers = #tpu.dot_dimension_numbers<[1], [0], [0], [1], [0, 0, 1, 1], [], []>} : vector<16x16xbf16>, vector<16x64xbf16>, vector<16x64xf32> -> vector<16x64xf32>
    %66 = tpu.concatenate %49, %65 in 1 : vector<16x64xf32>, vector<16x64xf32> -> vector<16x128xf32>
    %67 = vector.extract_strided_slice %33 {offsets = [16, 0], sizes = [16, 64], strides = [1, 1]} : vector<32x384xbf16> to vector<16x64xbf16>
    %68 = vector.extract_strided_slice %33 {offsets = [16, 128], sizes = [16, 64], strides = [1, 1]} : vector<32x384xbf16> to vector<16x64xbf16>
    %69 = vector.extract_strided_slice %33 {offsets = [16, 256], sizes = [16, 64], strides = [1, 1]} : vector<32x384xbf16> to vector<16x64xbf16>
    %cst_25 = arith.constant dense<0.000000e+00> : vector<16x16xf32>
    %70 = tpu.matmul %67, %68, %cst_25 {dimension_numbers = #tpu.dot_dimension_numbers<[1], [1], [0], [0], [0, 0, 1, 0], [], []>} : vector<16x64xbf16>, vector<16x64xbf16>, vector<16x16xf32> -> vector<16x16xf32>
    %cst_26 = arith.constant dense<0xFF800000> : vector<16xf32>
    %71 = vector.multi_reduction <maximumf>, %70, %cst_26 [1] : vector<16x16xf32> to vector<16xf32>
    %72 = vector.shape_cast %71 : vector<16xf32> to vector<16x1xf32>
    %73 = vector.broadcast %72 : vector<16x1xf32> to vector<16x16xf32>
    %74 = arith.subf %70, %73 : vector<16x16xf32>
    %75 = math.exp %74 : vector<16x16xf32>
    %cst_27 = arith.constant dense<0.000000e+00> : vector<16xf32>
    %76 = vector.multi_reduction <add>, %75, %cst_27 [1] : vector<16x16xf32> to vector<16xf32>
    %77 = vector.shape_cast %76 : vector<16xf32> to vector<16x1xf32>
    %78 = tpu.reciprocal %77 {approx = true} : vector<16x1xf32> -> vector<16x1xf32>
    %79 = vector.broadcast %78 : vector<16x1xf32> to vector<16x16xf32>
    %80 = arith.mulf %75, %79 : vector<16x16xf32>
    %81 = arith.truncf %80 : vector<16x16xf32> to vector<16x16xbf16>
    %cst_28 = arith.constant dense<0.000000e+00> : vector<16x64xf32>
    %82 = tpu.matmul %81, %69, %cst_28 {dimension_numbers = #tpu.dot_dimension_numbers<[1], [0], [0], [1], [0, 0, 1, 1], [], []>} : vector<16x16xbf16>, vector<16x64xbf16>, vector<16x64xf32> -> vector<16x64xf32>
    %83 = vector.extract_strided_slice %33 {offsets = [16, 64], sizes = [16, 64], strides = [1, 1]} : vector<32x384xbf16> to vector<16x64xbf16>
    %84 = vector.extract_strided_slice %33 {offsets = [16, 192], sizes = [16, 64], strides = [1, 1]} : vector<32x384xbf16> to vector<16x64xbf16>
    %85 = vector.extract_strided_slice %33 {offsets = [16, 320], sizes = [16, 64], strides = [1, 1]} : vector<32x384xbf16> to vector<16x64xbf16>
    %cst_29 = arith.constant dense<0.000000e+00> : vector<16x16xf32>
    %86 = tpu.matmul %83, %84, %cst_29 {dimension_numbers = #tpu.dot_dimension_numbers<[1], [1], [0], [0], [0, 0, 1, 0], [], []>} : vector<16x64xbf16>, vector<16x64xbf16>, vector<16x16xf32> -> vector<16x16xf32>
    %cst_30 = arith.constant dense<0xFF800000> : vector<16xf32>
    %87 = vector.multi_reduction <maximumf>, %86, %cst_30 [1] : vector<16x16xf32> to vector<16xf32>
    %88 = vector.shape_cast %87 : vector<16xf32> to vector<16x1xf32>
    %89 = vector.broadcast %88 : vector<16x1xf32> to vector<16x16xf32>
    %90 = arith.subf %86, %89 : vector<16x16xf32>
    %91 = math.exp %90 : vector<16x16xf32>
    %cst_31 = arith.constant dense<0.000000e+00> : vector<16xf32>
    %92 = vector.multi_reduction <add>, %91, %cst_31 [1] : vector<16x16xf32> to vector<16xf32>
    %93 = vector.shape_cast %92 : vector<16xf32> to vector<16x1xf32>
    %94 = tpu.reciprocal %93 {approx = true} : vector<16x1xf32> -> vector<16x1xf32>
    %95 = vector.broadcast %94 : vector<16x1xf32> to vector<16x16xf32>
    %96 = arith.mulf %91, %95 : vector<16x16xf32>
    %97 = arith.truncf %96 : vector<16x16xf32> to vector<16x16xbf16>
    %cst_32 = arith.constant dense<0.000000e+00> : vector<16x64xf32>
    %98 = tpu.matmul %97, %85, %cst_32 {dimension_numbers = #tpu.dot_dimension_numbers<[1], [0], [0], [1], [0, 0, 1, 1], [], []>} : vector<16x16xbf16>, vector<16x64xbf16>, vector<16x64xf32> -> vector<16x64xf32>
    %99 = tpu.concatenate %82, %98 in 1 : vector<16x64xf32>, vector<16x64xf32> -> vector<16x128xf32>
    %100 = tpu.concatenate %66, %99 in 0 : vector<16x128xf32>, vector<16x128xf32> -> vector<32x128xf32>
    %101 = arith.truncf %100 : vector<32x128xf32> to vector<32x128xbf16>
    %c0_33 = arith.constant 0 : index
    %c0_34 = arith.constant 0 : index
    %c0_35 = arith.constant 0 : index
    %102 = vector.load %arg8[%c0_33, %c0_34, %c0_35] : memref<1x128x128xbf16, #tpu.memory_space<vmem>>, vector<1x128x128xbf16>
    %103 = vector.shape_cast %102 : vector<1x128x128xbf16> to vector<128x128xbf16>
    %cst_36 = arith.constant dense<0.000000e+00> : vector<32x128xf32>
    %104 = tpu.matmul %101, %103, %cst_36 {dimension_numbers = #tpu.dot_dimension_numbers<[1], [0], [0], [1], [0, 0, 1, 1], [], []>} : vector<32x128xbf16>, vector<128x128xbf16>, vector<32x128xf32> -> vector<32x128xf32>
    %105 = arith.addf %4, %104 : vector<32x128xf32>
    %c0_37 = arith.constant 0 : index
    %c0_38 = arith.constant 0 : index
    %c0_39 = arith.constant 0 : index
    %106 = vector.load %arg9[%c0_37, %c0_38, %c0_39] : memref<1x1x128xf32, #tpu.memory_space<vmem>>, vector<1x1x128xf32>
    %107 = vector.shape_cast %106 : vector<1x1x128xf32> to vector<1x128xf32>
    %108 = vector.broadcast %107 : vector<1x128xf32> to vector<32x128xf32>
    %109 = arith.addf %105, %108 : vector<32x128xf32>
    %c0_40 = arith.constant 0 : index
    %c0_41 = arith.constant 0 : index
    %c0_42 = arith.constant 0 : index
    %110 = vector.load %arg10[%c0_40, %c0_41, %c0_42] : memref<1x1x128xf32, #tpu.memory_space<vmem>>, vector<1x1x128xf32>
    %111 = vector.shape_cast %110 : vector<1x1x128xf32> to vector<1x128xf32>
    %c0_43 = arith.constant 0 : index
    %c0_44 = arith.constant 0 : index
    %c0_45 = arith.constant 0 : index
    %112 = vector.load %arg11[%c0_43, %c0_44, %c0_45] : memref<1x1x128xf32, #tpu.memory_space<vmem>>, vector<1x1x128xf32>
    %113 = vector.shape_cast %112 : vector<1x1x128xf32> to vector<1x128xf32>
    %cst_46 = arith.constant dense<0.000000e+00> : vector<32xf32>
    %114 = vector.multi_reduction <add>, %109, %cst_46 [1] : vector<32x128xf32> to vector<32xf32>
    %115 = vector.shape_cast %114 : vector<32xf32> to vector<32x1xf32>
    %cst_47 = arith.constant 1.280000e+02 : f32
    %116 = vector.broadcast %cst_47 : f32 to vector<32x1xf32>
    %117 = arith.divf %115, %116 : vector<32x1xf32>
    %118 = vector.broadcast %117 : vector<32x1xf32> to vector<32x128xf32>
    %119 = arith.subf %109, %118 : vector<32x128xf32>
    %120 = arith.mulf %119, %119 : vector<32x128xf32>
    %cst_48 = arith.constant dense<0.000000e+00> : vector<32xf32>
    %121 = vector.multi_reduction <add>, %120, %cst_48 [1] : vector<32x128xf32> to vector<32xf32>
    %122 = vector.shape_cast %121 : vector<32xf32> to vector<32x1xf32>
    %cst_49 = arith.constant 1.280000e+02 : f32
    %123 = vector.broadcast %cst_49 : f32 to vector<32x1xf32>
    %124 = arith.divf %122, %123 : vector<32x1xf32>
    %cst_50 = arith.constant 9.99999974E-6 : f32
    %125 = vector.broadcast %cst_50 : f32 to vector<32x1xf32>
    %126 = arith.addf %124, %125 : vector<32x1xf32>
    %127 = math.rsqrt %126 : vector<32x1xf32>
    %128 = vector.broadcast %127 : vector<32x1xf32> to vector<32x128xf32>
    %129 = arith.mulf %119, %128 : vector<32x128xf32>
    %130 = vector.broadcast %111 : vector<1x128xf32> to vector<32x128xf32>
    %131 = arith.mulf %129, %130 : vector<32x128xf32>
    %132 = vector.broadcast %113 : vector<1x128xf32> to vector<32x128xf32>
    %133 = arith.addf %131, %132 : vector<32x128xf32>
    %134 = arith.truncf %133 : vector<32x128xf32> to vector<32x128xbf16>
    %c0_51 = arith.constant 0 : index
    %c0_52 = arith.constant 0 : index
    %c0_53 = arith.constant 0 : index
    %135 = vector.load %arg12[%c0_51, %c0_52, %c0_53] : memref<1x128x256xbf16, #tpu.memory_space<vmem>>, vector<1x128x256xbf16>
    %136 = vector.shape_cast %135 : vector<1x128x256xbf16> to vector<128x256xbf16>
    %cst_54 = arith.constant dense<0.000000e+00> : vector<32x256xf32>
    %137 = tpu.matmul %134, %136, %cst_54 {dimension_numbers = #tpu.dot_dimension_numbers<[1], [0], [0], [1], [0, 0, 1, 1], [], []>} : vector<32x128xbf16>, vector<128x256xbf16>, vector<32x256xf32> -> vector<32x256xf32>
    %c0_55 = arith.constant 0 : index
    %c0_56 = arith.constant 0 : index
    %c0_57 = arith.constant 0 : index
    %138 = vector.load %arg13[%c0_55, %c0_56, %c0_57] : memref<1x1x256xf32, #tpu.memory_space<vmem>>, vector<1x1x256xf32>
    %139 = vector.shape_cast %138 : vector<1x1x256xf32> to vector<1x256xf32>
    %140 = vector.broadcast %139 : vector<1x256xf32> to vector<32x256xf32>
    %141 = arith.addf %137, %140 : vector<32x256xf32>
    %142 = math.tanh %141 : vector<32x256xf32>
    %143 = arith.truncf %142 : vector<32x256xf32> to vector<32x256xbf16>
    %c0_58 = arith.constant 0 : index
    %c0_59 = arith.constant 0 : index
    %c0_60 = arith.constant 0 : index
    %144 = vector.load %arg14[%c0_58, %c0_59, %c0_60] : memref<1x256x128xbf16, #tpu.memory_space<vmem>>, vector<1x256x128xbf16>
    %145 = vector.shape_cast %144 : vector<1x256x128xbf16> to vector<256x128xbf16>
    %cst_61 = arith.constant dense<0.000000e+00> : vector<32x128xf32>
    %146 = tpu.matmul %143, %145, %cst_61 {dimension_numbers = #tpu.dot_dimension_numbers<[1], [0], [0], [1], [0, 0, 1, 1], [], []>} : vector<32x256xbf16>, vector<256x128xbf16>, vector<32x128xf32> -> vector<32x128xf32>
    %c0_62 = arith.constant 0 : index
    %c0_63 = arith.constant 0 : index
    %c0_64 = arith.constant 0 : index
    %147 = vector.load %arg15[%c0_62, %c0_63, %c0_64] : memref<1x1x128xf32, #tpu.memory_space<vmem>>, vector<1x1x128xf32>
    %148 = vector.shape_cast %147 : vector<1x1x128xf32> to vector<1x128xf32>
    %149 = vector.broadcast %148 : vector<1x128xf32> to vector<32x128xf32>
    %150 = arith.addf %146, %149 : vector<32x128xf32>
    %151 = arith.addf %109, %150 : vector<32x128xf32>
    %152 = vector.shape_cast %151 : vector<32x128xf32> to vector<2x16x128xf32>
    %c0_65 = arith.constant 0 : index
    %c0_66 = arith.constant 0 : index
    %c0_67 = arith.constant 0 : index
    %153 = vector.load %arg19[%c0_65, %c0_66, %c0_67] : memref<2x16x128xf32, #tpu.memory_space<vmem>>, vector<2x16x128xf32>
    tpu.vector_store %arg19[%c0_65, %c0_66, %c0_67], %152 {strides = array<i32>} : memref<2x16x128xf32, #tpu.memory_space<vmem>>, vector<2x16x128xf32>,
    %c1_i32 = arith.constant 1 : i32
    %154 = arith.cmpi eq, %arg1, %c1_i32 : i32
    %155 = arith.extui %154 : i1 to i32
    %c0_i32_68 = arith.constant 0 : i32
    %156 = arith.cmpi ne, %155, %c0_i32_68 : i32
    scf.if %156 {
      %c0_69 = arith.constant 0 : index
      %c0_70 = arith.constant 0 : index
      %157 = vector.load %arg16[%c0_69, %c0_70] : memref<1x128xf32, #tpu.memory_space<vmem>>, vector<1x128xf32>
      %c0_71 = arith.constant 0 : index
      %c0_72 = arith.constant 0 : index
      %158 = vector.load %arg17[%c0_71, %c0_72] : memref<1x128xf32, #tpu.memory_space<vmem>>, vector<1x128xf32>
      %cst_73 = arith.constant dense<0.000000e+00> : vector<32xf32>
      %159 = vector.multi_reduction <add>, %151, %cst_73 [1] : vector<32x128xf32> to vector<32xf32>
      %160 = vector.shape_cast %159 : vector<32xf32> to vector<32x1xf32>
      %cst_74 = arith.constant 1.280000e+02 : f32
      %161 = vector.broadcast %cst_74 : f32 to vector<32x1xf32>
      %162 = arith.divf %160, %161 : vector<32x1xf32>
      %163 = vector.broadcast %162 : vector<32x1xf32> to vector<32x128xf32>
      %164 = arith.subf %151, %163 : vector<32x128xf32>
      %165 = arith.mulf %164, %164 : vector<32x128xf32>
      %cst_75 = arith.constant dense<0.000000e+00> : vector<32xf32>
      %166 = vector.multi_reduction <add>, %165, %cst_75 [1] : vector<32x128xf32> to vector<32xf32>
      %167 = vector.shape_cast %166 : vector<32xf32> to vector<32x1xf32>
      %cst_76 = arith.constant 1.280000e+02 : f32
      %168 = vector.broadcast %cst_76 : f32 to vector<32x1xf32>
      %169 = arith.divf %167, %168 : vector<32x1xf32>
      %cst_77 = arith.constant 9.99999974E-6 : f32
      %170 = vector.broadcast %cst_77 : f32 to vector<32x1xf32>
      %171 = arith.addf %169, %170 : vector<32x1xf32>
      %172 = math.rsqrt %171 : vector<32x1xf32>
      %173 = vector.broadcast %172 : vector<32x1xf32> to vector<32x128xf32>
      %174 = arith.mulf %164, %173 : vector<32x128xf32>
      %175 = vector.broadcast %157 : vector<1x128xf32> to vector<32x128xf32>
      %176 = arith.mulf %174, %175 : vector<32x128xf32>
      %177 = vector.broadcast %158 : vector<1x128xf32> to vector<32x128xf32>
      %178 = arith.addf %176, %177 : vector<32x128xf32>
      %179 = vector.shape_cast %178 : vector<32x128xf32> to vector<2x16x128xf32>
      %c0_78 = arith.constant 0 : index
      %c0_79 = arith.constant 0 : index
      %c0_80 = arith.constant 0 : index
      %180 = vector.load %arg18[%c0_78, %c0_79, %c0_80] : memref<2x16x128xf32, #tpu.memory_space<vmem>>, vector<2x16x128xf32>
      tpu.vector_store %arg18[%c0_78, %c0_79, %c0_80], %179 {strides = array<i32>} : memref<2x16x128xf32, #tpu.memory_space<vmem>>, vector<2x16x128xf32>,
    } else {
    }
    return
  }
  func.func @transform_0(%arg0: i32, %arg1: i32) -> (i32, i32, i32) {
    %c0_i32 = arith.constant 0 : i32
    %c0_i32_0 = arith.constant 0 : i32
    %c0_i32_1 = arith.constant 0 : i32
    return %arg0, %c0_i32, %c0_i32_0 : i32, i32, i32
  }
  func.func @transform_1(%arg0: i32, %arg1: i32) -> (i32, i32) {
    %c0_i32 = arith.constant 0 : i32
    %c0_i32_0 = arith.constant 0 : i32
    %c0_i32_1 = arith.constant 0 : i32
    return %c0_i32, %c0_i32_0 : i32, i32
  }
  func.func @transform_2(%arg0: i32, %arg1: i32) -> (i32, i32) {
    %c0_i32 = arith.constant 0 : i32
    %c0_i32_0 = arith.constant 0 : i32
    %c0_i32_1 = arith.constant 0 : i32
    return %c0_i32, %c0_i32_0 : i32, i32
  }
  func.func @transform_3(%arg0: i32, %arg1: i32) -> (i32, i32, i32) {
    %c0_i32 = arith.constant 0 : i32
    %c0_i32_0 = arith.constant 0 : i32
    %c0_i32_1 = arith.constant 0 : i32
    return %arg1, %c0_i32, %c0_i32_0 : i32, i32, i32
  }
  func.func @transform_4(%arg0: i32, %arg1: i32) -> (i32, i32, i32) {
    %c0_i32 = arith.constant 0 : i32
    %c0_i32_0 = arith.constant 0 : i32
    %c0_i32_1 = arith.constant 0 : i32
    return %arg1, %c0_i32, %c0_i32_0 : i32, i32, i32
  }
  func.func @transform_5(%arg0: i32, %arg1: i32) -> (i32, i32, i32) {
    %c0_i32 = arith.constant 0 : i32
    %c0_i32_0 = arith.constant 0 : i32
    %c0_i32_1 = arith.constant 0 : i32
    return %arg1, %c0_i32, %c0_i32_0 : i32, i32, i32
  }
  func.func @transform_6(%arg0: i32, %arg1: i32) -> (i32, i32, i32) {
    %c0_i32 = arith.constant 0 : i32
    %c0_i32_0 = arith.constant 0 : i32
    %c0_i32_1 = arith.constant 0 : i32
    return %arg1, %c0_i32, %c0_i32_0 : i32, i32, i32
  }
  func.func @transform_7(%arg0: i32, %arg1: i32) -> (i32, i32, i32) {
    %c0_i32 = arith.constant 0 : i32
    %c0_i32_0 = arith.constant 0 : i32
    %c0_i32_1 = arith.constant 0 : i32
    return %arg1, %c0_i32, %c0_i32_0 : i32, i32, i32
  }
  func.func @transform_8(%arg0: i32, %arg1: i32) -> (i32, i32, i32) {
    %c0_i32 = arith.constant 0 : i32
    %c0_i32_0 = arith.constant 0 : i32
    %c0_i32_1 = arith.constant 0 : i32
    return %arg1, %c0_i32, %c0_i32_0 : i32, i32, i32
  }
  func.func @transform_9(%arg0: i32, %arg1: i32) -> (i32, i32, i32) {
    %c0_i32 = arith.constant 0 : i32
    %c0_i32_0 = arith.constant 0 : i32
    %c0_i32_1 = arith.constant 0 : i32
    return %arg1, %c0_i32, %c0_i32_0 : i32, i32, i32
  }
  func.func @transform_10(%arg0: i32, %arg1: i32) -> (i32, i32, i32) {
    %c0_i32 = arith.constant 0 : i32
    %c0_i32_0 = arith.constant 0 : i32
    %c0_i32_1 = arith.constant 0 : i32
    return %arg1, %c0_i32, %c0_i32_0 : i32, i32, i32
  }
  func.func @transform_11(%arg0: i32, %arg1: i32) -> (i32, i32, i32) {
    %c0_i32 = arith.constant 0 : i32
    %c0_i32_0 = arith.constant 0 : i32
    %c0_i32_1 = arith.constant 0 : i32
    return %arg1, %c0_i32, %c0_i32_0 : i32, i32, i32
  }
  func.func @transform_12(%arg0: i32, %arg1: i32) -> (i32, i32, i32) {
    %c0_i32 = arith.constant 0 : i32
    %c0_i32_0 = arith.constant 0 : i32
    %c0_i32_1 = arith.constant 0 : i32
    return %arg1, %c0_i32, %c0_i32_0 : i32, i32, i32
  }
  func.func @transform_13(%arg0: i32, %arg1: i32) -> (i32, i32, i32) {
    %c0_i32 = arith.constant 0 : i32
    %c0_i32_0 = arith.constant 0 : i32
    %c0_i32_1 = arith.constant 0 : i32
    return %arg1, %c0_i32, %c0_i32_0 : i32, i32, i32
  }
  func.func @transform_14(%arg0: i32, %arg1: i32) -> (i32, i32) {
    %c0_i32 = arith.constant 0 : i32
    %c0_i32_0 = arith.constant 0 : i32
    %c0_i32_1 = arith.constant 0 : i32
    return %c0_i32, %c0_i32_0 : i32, i32
  }
  func.func @transform_15(%arg0: i32, %arg1: i32) -> (i32, i32) {
    %c0_i32 = arith.constant 0 : i32
    %c0_i32_0 = arith.constant 0 : i32
    %c0_i32_1 = arith.constant 0 : i32
    return %c0_i32, %c0_i32_0 : i32, i32
  }
  func.func @transform_16(%arg0: i32, %arg1: i32) -> (i32, i32, i32) {
    %c0_i32 = arith.constant 0 : i32
    %c0_i32_0 = arith.constant 0 : i32
    %c0_i32_1 = arith.constant 0 : i32
    return %arg0, %c0_i32, %c0_i32_0 : i32, i32, i32
  }
}

</mosaic_0001>

<llo_original>
// kernel: encoder_vit_forward.1
$region0: #{encoder_vit_forward.1}
  #allocation0 [shape = 'u32[]', space=smem, size = 0x4, offset = 0x4, fixed_abs, tag = 'smem constant byte address 0x4 - core index']
  #allocation1 [shape = 'u32[144,128]{1,0:T(1,128)}', space=vmem, size = 0x12000, scoped, tag = 'internal scratch']
  #allocation2 [shape = 'f32[2,16,128]{2,1,0:T(8,128)}', space=vmem, size = 0x4000, scoped, tag = 'scratch operand']
  %s0 = inlined_call_operand.vmem [shape: f32[2,16,128], index: 0, kind: input, shape index: {}]
  %s1 = inlined_call_operand.vmem [shape: bf16[128,128], index: 1, kind: input, shape index: {}]
  %s2 = inlined_call_operand.vmem [shape: f32[16,128], index: 2, kind: input, shape index: {}]
  %s3 = inlined_call_operand.vmem [shape: f32[2,1,128], index: 3, kind: input, shape index: {}]
  %s4 = inlined_call_operand.vmem [shape: f32[2,1,128], index: 4, kind: input, shape index: {}]
  %s5 = inlined_call_operand.vmem [shape: bf16[2,128,384], index: 5, kind: input, shape index: {}]
  %s6 = inlined_call_operand.vmem [shape: bf16[2,128,128], index: 6, kind: input, shape index: {}]
  %s7 = inlined_call_operand.vmem [shape: f32[2,1,128], index: 7, kind: input, shape index: {}]
  %s8 = inlined_call_operand.vmem [shape: f32[2,1,128], index: 8, kind: input, shape index: {}]
  %s9 = inlined_call_operand.vmem [shape: f32[2,1,128], index: 9, kind: input, shape index: {}]
  %s10 = inlined_call_operand.vmem [shape: bf16[2,128,256], index: 10, kind: input, shape index: {}]
  %s11 = inlined_call_operand.vmem [shape: f32[2,1,256], index: 11, kind: input, shape index: {}]
  %s12 = inlined_call_operand.vmem [shape: bf16[2,256,128], index: 12, kind: input, shape index: {}]
  %s13 = inlined_call_operand.vmem [shape: f32[2,1,128], index: 13, kind: input, shape index: {}]
  %s14 = inlined_call_operand.vmem [shape: f32[1,128], index: 14, kind: input, shape index: {}]
  %s15 = inlined_call_operand.vmem [shape: f32[1,128], index: 15, kind: input, shape index: {}]
  %s16 = inlined_call_operand.hbm [shape: f32[2,16,128], index: 16, kind: output, shape index: {}]
  %s17 = sld [smem:[#allocation0]]
  $region105: #{encoder_vit_forward.1} parent=0
    _
  %s19 = ssub.s32 1, %s17
  %s20 = scalar_select 0, %s19, %s17
  $region1: #{encoder_vit_forward.1} parent=0
    #allocation3 [shape = 'u8[16384]{0}', space=vmem, size = 0x4000, scoped, tag = 'output window, operand 0, single buffered']
    #allocation4 [shape = 's32[2]{0}', space=sflag, size = 0x8, scoped, tag = 'scoped memory for encoder_vit_forward.1']
    %21 = vsyncpa [#allocation4], 0
    loop: start=0, step=1, limit=4
    $region2: #{encoder_vit_forward.1} parent=1 // loop_pre_header
      _
    $region3: #{encoder_vit_forward.1} parent=1 // loop_header
      %s23 = sphi 0, %s27
      %p24 = scmp.ge.s32.totalorder %s23, 4
      %s30 = sphi 0, %s42
      %s31 = sphi 0, %s38
      %s32 = sphi 0, %s30
      %s33 = sphi 0, %s31
      %s34 = sphi 0, %s32
      %s35 = sphi 0, %s33
      %s45 = sphi 0, %s47
      %s48 = sphi 0, %s45
      %s49 = sphi 0, %s48
      %s65 = sphi 0, %s49
      %s69 = sphi 0, %s69
      %s71 = sphi 0, %s69
      %s72 = sphi 0, %s71
      %s86 = sphi 0, %s72
      %s90 = sphi 0, %s90
      %s92 = sphi 0, %s90
      %s93 = sphi 0, %s92
      %s107 = sphi 0, %s93
      %s113 = sphi 0, %s115
      %s116 = sphi 0, %s113
      %s117 = sphi 0, %s116
      %s133 = sphi 0, %s117
      %s139 = sphi 0, %s141
      %s142 = sphi 0, %s139
      %s143 = sphi 0, %s142
      %s159 = sphi 0, %s143
      %s165 = sphi 0, %s167
      %s168 = sphi 0, %s165
      %s169 = sphi 0, %s168
      %s185 = sphi 0, %s169
      %s191 = sphi 0, %s193
      %s194 = sphi 0, %s191
      %s195 = sphi 0, %s194
      %s211 = sphi 0, %s195
      %s217 = sphi 0, %s219
      %s220 = sphi 0, %s217
      %s221 = sphi 0, %s220
      %s237 = sphi 0, %s221
      %s243 = sphi 0, %s245
      %s246 = sphi 0, %s243
      %s247 = sphi 0, %s246
      %s263 = sphi 0, %s247
      %s269 = sphi 0, %s271
      %s272 = sphi 0, %s269
      %s273 = sphi 0, %s272
      %s289 = sphi 0, %s273
      %s295 = sphi 0, %s297
      %s298 = sphi 0, %s295
      %s299 = sphi 0, %s298
      %s315 = sphi 0, %s299
      %s321 = sphi 0, %s323
      %s324 = sphi 0, %s321
      %s325 = sphi 0, %s324
      %s341 = sphi 0, %s325
      %s347 = sphi 0, %s349
      %s350 = sphi 0, %s347
      %s351 = sphi 0, %s350
      %s367 = sphi 0, %s351
      %s373 = sphi 0, %s375
      %s376 = sphi 0, %s373
      %s377 = sphi 0, %s376
      %s393 = sphi 0, %s377
      %s397 = sphi 0, %s397
      %s399 = sphi 0, %s397
      %s400 = sphi 0, %s399
      %s414 = sphi 0, %s400
      %s418 = sphi 0, %s418
      %s420 = sphi 0, %s418
      %s421 = sphi 0, %s420
      %s435 = sphi 0, %s421
      %s441 = sphi 0, %s443
      %s444 = sphi 0, %s441
      %s445 = sphi 0, %s444
      %s461 = sphi 0, %s445
    $region4: #{encoder_vit_forward.1} parent=1 // loop_header_branch
      %26 = sbr.rel (%p24) target = $region8
    $region5: #{encoder_vit_forward.1} parent=1 // loop_body
      %s28 = ssub.s32 %s23, 1
      %s29 = ssub.s32 %s23, 2
      %s36 = sadd.s32 1, %s31
      %p37 = scmp.ge.s32.totalorder %s36, 2
      %s38 = scalar_select %p37, 0, %s36
      %s39 = sadd.s32 1, %s30
      %s40 = scalar_select %p37, %s39, %s30
      %p41 = scmp.ge.s32.totalorder %s40, 1
      %s42 = scalar_select %p41, 0, %s40
      %s43 = ssub.s32 %s30, %s42
      %p44 = scmp.eq.s32.totalorder %s43, 0
      %s46 = sadd.s32 %s45, 1
      %s47 = scalar_select %p44, %s45, %s46
      %p50 = pneg %p44
      %p51 = scmp.eq.s32.totalorder %s23, 1
      %p52 = por %p50, %p51
      %p53 = scmp.ne.s32.totalorder %s45, %s48
      %p54 = scmp.eq.s32.totalorder %s23, 0
      %p55 = por %p53, %p54
      %p56 = scmp.ne.s32.totalorder %s45, %s48
      %p57 = scmp.eq.s32.totalorder %s28, 1
      %p58 = por %p56, %p57
      %p59 = scmp.ne.s32.totalorder %s48, %s49
      %p60 = scmp.eq.s32.totalorder %s28, 0
      %p61 = por %p59, %p60
      %p62 = scmp.ne.s32.totalorder %s48, %s49
      %p63 = scmp.eq.s32.totalorder %s29, 1
      %p64 = por %p62, %p63
      %p66 = scmp.ne.s32.totalorder %s49, %s65
      %p67 = scmp.eq.s32.totalorder %s29, 0
      %p68 = por %p66, %p67
      %s70 = sadd.s32 %s69, 1
      %p73 = scmp.eq.s32.totalorder %s23, 1
      %p74 = scmp.ne.s32.totalorder %s69, %s71
      %p75 = scmp.eq.s32.totalorder %s23, 0
      %p76 = por %p74, %p75
      %p77 = scmp.ne.s32.totalorder %s69, %s71
      %p78 = scmp.eq.s32.totalorder %s28, 1
      %p79 = por %p77, %p78
      %p80 = scmp.ne.s32.totalorder %s71, %s72
      %p81 = scmp.eq.s32.totalorder %s28, 0
      %p82 = por %p80, %p81
      %p83 = scmp.ne.s32.totalorder %s71, %s72
      %p84 = scmp.eq.s32.totalorder %s29, 1
      %p85 = por %p83, %p84
      %p87 = scmp.ne.s32.totalorder %s72, %s86
      %p88 = scmp.eq.s32.totalorder %s29, 0
      %p89 = por %p87, %p88
      %s91 = sadd.s32 %s90, 1
      %p94 = scmp.eq.s32.totalorder %s23, 1
      %p95 = scmp.ne.s32.totalorder %s90, %s92
      %p96 = scmp.eq.s32.totalorder %s23, 0
      %p97 = por %p95, %p96
      %p98 = scmp.ne.s32.totalorder %s90, %s92
      %p99 = scmp.eq.s32.totalorder %s28, 1
      %p100 = por %p98, %p99
      %p101 = scmp.ne.s32.totalorder %s92, %s93
      %p102 = scmp.eq.s32.totalorder %s28, 0
      %p103 = por %p101, %p102
      %p104 = scmp.ne.s32.totalorder %s92, %s93
      %p105 = scmp.eq.s32.totalorder %s29, 1
      %p106 = por %p104, %p105
      %p108 = scmp.ne.s32.totalorder %s93, %s107
      %p109 = scmp.eq.s32.totalorder %s29, 0
      %p110 = por %p108, %p109
      %s111 = ssub.s32 %s31, %s38
      %p112 = scmp.eq.s32.totalorder %s111, 0
      %s114 = sadd.s32 %s113, 1
      %s115 = scalar_select %p112, %s113, %s114
      %p118 = pneg %p112
      %p119 = scmp.eq.s32.totalorder %s23, 1
      %p120 = por %p118, %p119
      %p121 = scmp.ne.s32.totalorder %s113, %s116
      %p122 = scmp.eq.s32.totalorder %s23, 0
      %p123 = por %p121, %p122
      %p124 = scmp.ne.s32.totalorder %s113, %s116
      %p125 = scmp.eq.s32.totalorder %s28, 1
      %p126 = por %p124, %p125
      %p127 = scmp.ne.s32.totalorder %s116, %s117
      %p128 = scmp.eq.s32.totalorder %s28, 0
      %p129 = por %p127, %p128
      %p130 = scmp.ne.s32.totalorder %s116, %s117
      %p131 = scmp.eq.s32.totalorder %s29, 1
      %p132 = por %p130, %p131
      %p134 = scmp.ne.s32.totalorder %s117, %s133
      %p135 = scmp.eq.s32.totalorder %s29, 0
      %p136 = por %p134, %p135
      %s137 = ssub.s32 %s31, %s38
      %p138 = scmp.eq.s32.totalorder %s137, 0
      %s140 = sadd.s32 %s139, 1
      %s141 = scalar_select %p138, %s139, %s140
      %p144 = pneg %p138
      %p145 = scmp.eq.s32.totalorder %s23, 1
      %p146 = por %p144, %p145
      %p147 = scmp.ne.s32.totalorder %s139, %s142
      %p148 = scmp.eq.s32.totalorder %s23, 0
      %p149 = por %p147, %p148
      %p150 = scmp.ne.s32.totalorder %s139, %s142
      %p151 = scmp.eq.s32.totalorder %s28, 1
      %p152 = por %p150, %p151
      %p153 = scmp.ne.s32.totalorder %s142, %s143
      %p154 = scmp.eq.s32.totalorder %s28, 0
      %p155 = por %p153, %p154
      %p156 = scmp.ne.s32.totalorder %s142, %s143
      %p157 = scmp.eq.s32.totalorder %s29, 1
      %p158 = por %p156, %p157
      %p160 = scmp.ne.s32.totalorder %s143, %s159
      %p161 = scmp.eq.s32.totalorder %s29, 0
      %p162 = por %p160, %p161
      %s163 = ssub.s32 %s31, %s38
      %p164 = scmp.eq.s32.totalorder %s163, 0
      %s166 = sadd.s32 %s165, 1
      %s167 = scalar_select %p164, %s165, %s166
      %p170 = pneg %p164
      %p171 = scmp.eq.s32.totalorder %s23, 1
      %p172 = por %p170, %p171
      %p173 = scmp.ne.s32.totalorder %s165, %s168
      %p174 = scmp.eq.s32.totalorder %s23, 0
      %p175 = por %p173, %p174
      %p176 = scmp.ne.s32.totalorder %s165, %s168
      %p177 = scmp.eq.s32.totalorder %s28, 1
      %p178 = por %p176, %p177
      %p179 = scmp.ne.s32.totalorder %s168, %s169
      %p180 = scmp.eq.s32.totalorder %s28, 0
      %p181 = por %p179, %p180
      %p182 = scmp.ne.s32.totalorder %s168, %s169
      %p183 = scmp.eq.s32.totalorder %s29, 1
      %p184 = por %p182, %p183
      %p186 = scmp.ne.s32.totalorder %s169, %s185
      %p187 = scmp.eq.s32.totalorder %s29, 0
      %p188 = por %p186, %p187
      %s189 = ssub.s32 %s31, %s38
      %p190 = scmp.eq.s32.totalorder %s189, 0
      %s192 = sadd.s32 %s191, 1
      %s193 = scalar_select %p190, %s191, %s192
      %p196 = pneg %p190
      %p197 = scmp.eq.s32.totalorder %s23, 1
      %p198 = por %p196, %p197
      %p199 = scmp.ne.s32.totalorder %s191, %s194
      %p200 = scmp.eq.s32.totalorder %s23, 0
      %p201 = por %p199, %p200
      %p202 = scmp.ne.s32.totalorder %s191, %s194
      %p203 = scmp.eq.s32.totalorder %s28, 1
      %p204 = por %p202, %p203
      %p205 = scmp.ne.s32.totalorder %s194, %s195
      %p206 = scmp.eq.s32.totalorder %s28, 0
      %p207 = por %p205, %p206
      %p208 = scmp.ne.s32.totalorder %s194, %s195
      %p209 = scmp.eq.s32.totalorder %s29, 1
      %p210 = por %p208, %p209
      %p212 = scmp.ne.s32.totalorder %s195, %s211
      %p213 = scmp.eq.s32.totalorder %s29, 0
      %p214 = por %p212, %p213
      %s215 = ssub.s32 %s31, %s38
      %p216 = scmp.eq.s32.totalorder %s215, 0
      %s218 = sadd.s32 %s217, 1
      %s219 = scalar_select %p216, %s217, %s218
      %p222 = pneg %p216
      %p223 = scmp.eq.s32.totalorder %s23, 1
      %p224 = por %p222, %p223
      %p225 = scmp.ne.s32.totalorder %s217, %s220
      %p226 = scmp.eq.s32.totalorder %s23, 0
      %p227 = por %p225, %p226
      %p228 = scmp.ne.s32.totalorder %s217, %s220
      %p229 = scmp.eq.s32.totalorder %s28, 1
      %p230 = por %p228, %p229
      %p231 = scmp.ne.s32.totalorder %s220, %s221
      %p232 = scmp.eq.s32.totalorder %s28, 0
      %p233 = por %p231, %p232
      %p234 = scmp.ne.s32.totalorder %s220, %s221
      %p235 = scmp.eq.s32.totalorder %s29, 1
      %p236 = por %p234, %p235
      %p238 = scmp.ne.s32.totalorder %s221, %s237
      %p239 = scmp.eq.s32.totalorder %s29, 0
      %p240 = por %p238, %p239
      %s241 = ssub.s32 %s31, %s38
      %p242 = scmp.eq.s32.totalorder %s241, 0
      %s244 = sadd.s32 %s243, 1
      %s245 = scalar_select %p242, %s243, %s244
      %p248 = pneg %p242
      %p249 = scmp.eq.s32.totalorder %s23, 1
      %p250 = por %p248, %p249
      %p251 = scmp.ne.s32.totalorder %s243, %s246
      %p252 = scmp.eq.s32.totalorder %s23, 0
      %p253 = por %p251, %p252
      %p254 = scmp.ne.s32.totalorder %s243, %s246
      %p255 = scmp.eq.s32.totalorder %s28, 1
      %p256 = por %p254, %p255
      %p257 = scmp.ne.s32.totalorder %s246, %s247
      %p258 = scmp.eq.s32.totalorder %s28, 0
      %p259 = por %p257, %p258
      %p260 = scmp.ne.s32.totalorder %s246, %s247
      %p261 = scmp.eq.s32.totalorder %s29, 1
      %p262 = por %p260, %p261
      %p264 = scmp.ne.s32.totalorder %s247, %s263
      %p265 = scmp.eq.s32.totalorder %s29, 0
      %p266 = por %p264, %p265
      %s267 = ssub.s32 %s31, %s38
      %p268 = scmp.eq.s32.totalorder %s267, 0
      %s270 = sadd.s32 %s269, 1
      %s271 = scalar_select %p268, %s269, %s270
      %p274 = pneg %p268
      %p275 = scmp.eq.s32.totalorder %s23, 1
      %p276 = por %p274, %p275
      %p277 = scmp.ne.s32.totalorder %s269, %s272
      %p278 = scmp.eq.s32.totalorder %s23, 0
      %p279 = por %p277, %p278
      %p280 = scmp.ne.s32.totalorder %s269, %s272
      %p281 = scmp.eq.s32.totalorder %s28, 1
      %p282 = por %p280, %p281
      %p283 = scmp.ne.s32.totalorder %s272, %s273
      %p284 = scmp.eq.s32.totalorder %s28, 0
      %p285 = por %p283, %p284
      %p286 = scmp.ne.s32.totalorder %s272, %s273
      %p287 = scmp.eq.s32.totalorder %s29, 1
      %p288 = por %p286, %p287
      %p290 = scmp.ne.s32.totalorder %s273, %s289
      %p291 = scmp.eq.s32.totalorder %s29, 0
      %p292 = por %p290, %p291
      %s293 = ssub.s32 %s31, %s38
      %p294 = scmp.eq.s32.totalorder %s293, 0
      %s296 = sadd.s32 %s295, 1
      %s297 = scalar_select %p294, %s295, %s296
      %p300 = pneg %p294
      %p301 = scmp.eq.s32.totalorder %s23, 1
      %p302 = por %p300, %p301
      %p303 = scmp.ne.s32.totalorder %s295, %s298
      %p304 = scmp.eq.s32.totalorder %s23, 0
      %p305 = por %p303, %p304
      %p306 = scmp.ne.s32.totalorder %s295, %s298
      %p307 = scmp.eq.s32.totalorder %s28, 1
      %p308 = por %p306, %p307
      %p309 = scmp.ne.s32.totalorder %s298, %s299
      %p310 = scmp.eq.s32.totalorder %s28, 0
      %p311 = por %p309, %p310
      %p312 = scmp.ne.s32.totalorder %s298, %s299
      %p313 = scmp.eq.s32.totalorder %s29, 1
      %p314 = por %p312, %p313
      %p316 = scmp.ne.s32.totalorder %s299, %s315
      %p317 = scmp.eq.s32.totalorder %s29, 0
      %p318 = por %p316, %p317
      %s319 = ssub.s32 %s31, %s38
      %p320 = scmp.eq.s32.totalorder %s319, 0
      %s322 = sadd.s32 %s321, 1
      %s323 = scalar_select %p320, %s321, %s322
      %p326 = pneg %p320
      %p327 = scmp.eq.s32.totalorder %s23, 1
      %p328 = por %p326, %p327
      %p329 = scmp.ne.s32.totalorder %s321, %s324
      %p330 = scmp.eq.s32.totalorder %s23, 0
      %p331 = por %p329, %p330
      %p332 = scmp.ne.s32.totalorder %s321, %s324
      %p333 = scmp.eq.s32.totalorder %s28, 1
      %p334 = por %p332, %p333
      %p335 = scmp.ne.s32.totalorder %s324, %s325
      %p336 = scmp.eq.s32.totalorder %s28, 0
      %p337 = por %p335, %p336
      %p338 = scmp.ne.s32.totalorder %s324, %s325
      %p339 = scmp.eq.s32.totalorder %s29, 1
      %p340 = por %p338, %p339
      %p342 = scmp.ne.s32.totalorder %s325, %s341
      %p343 = scmp.eq.s32.totalorder %s29, 0
      %p344 = por %p342, %p343
      %s345 = ssub.s32 %s31, %s38
      %p346 = scmp.eq.s32.totalorder %s345, 0
      %s348 = sadd.s32 %s347, 1
      %s349 = scalar_select %p346, %s347, %s348
      %p352 = pneg %p346
      %p353 = scmp.eq.s32.totalorder %s23, 1
      %p354 = por %p352, %p353
      %p355 = scmp.ne.s32.totalorder %s347, %s350
      %p356 = scmp.eq.s32.totalorder %s23, 0
      %p357 = por %p355, %p356
      %p358 = scmp.ne.s32.totalorder %s347, %s350
      %p359 = scmp.eq.s32.totalorder %s28, 1
      %p360 = por %p358, %p359
      %p361 = scmp.ne.s32.totalorder %s350, %s351
      %p362 = scmp.eq.s32.totalorder %s28, 0
      %p363 = por %p361, %p362
      %p364 = scmp.ne.s32.totalorder %s350, %s351
      %p365 = scmp.eq.s32.totalorder %s29, 1
      %p366 = por %p364, %p365
      %p368 = scmp.ne.s32.totalorder %s351, %s367
      %p369 = scmp.eq.s32.totalorder %s29, 0
      %p370 = por %p368, %p369
      %s371 = ssub.s32 %s31, %s38
      %p372 = scmp.eq.s32.totalorder %s371, 0
      %s374 = sadd.s32 %s373, 1
      %s375 = scalar_select %p372, %s373, %s374
      %p378 = pneg %p372
      %p379 = scmp.eq.s32.totalorder %s23, 1
      %p380 = por %p378, %p379
      %p381 = scmp.ne.s32.totalorder %s373, %s376
      %p382 = scmp.eq.s32.totalorder %s23, 0
      %p383 = por %p381, %p382
      %p384 = scmp.ne.s32.totalorder %s373, %s376
      %p385 = scmp.eq.s32.totalorder %s28, 1
      %p386 = por %p384, %p385
      %p387 = scmp.ne.s32.totalorder %s376, %s377
      %p388 = scmp.eq.s32.totalorder %s28, 0
      %p389 = por %p387, %p388
      %p390 = scmp.ne.s32.totalorder %s376, %s377
      %p391 = scmp.eq.s32.totalorder %s29, 1
      %p392 = por %p390, %p391
      %p394 = scmp.ne.s32.totalorder %s377, %s393
      %p395 = scmp.eq.s32.totalorder %s29, 0
      %p396 = por %p394, %p395
      %s398 = sadd.s32 %s397, 1
      %p401 = scmp.eq.s32.totalorder %s23, 1
      %p402 = scmp.ne.s32.totalorder %s397, %s399
      %p403 = scmp.eq.s32.totalorder %s23, 0
      %p404 = por %p402, %p403
      %p405 = scmp.ne.s32.totalorder %s397, %s399
      %p406 = scmp.eq.s32.totalorder %s28, 1
      %p407 = por %p405, %p406
      %p408 = scmp.ne.s32.totalorder %s399, %s400
      %p409 = scmp.eq.s32.totalorder %s28, 0
      %p410 = por %p408, %p409
      %p411 = scmp.ne.s32.totalorder %s399, %s400
      %p412 = scmp.eq.s32.totalorder %s29, 1
      %p413 = por %p411, %p412
      %p415 = scmp.ne.s32.totalorder %s400, %s414
      %p416 = scmp.eq.s32.totalorder %s29, 0
      %p417 = por %p415, %p416
      %s419 = sadd.s32 %s418, 1
      %p422 = scmp.eq.s32.totalorder %s23, 1
      %p423 = scmp.ne.s32.totalorder %s418, %s420
      %p424 = scmp.eq.s32.totalorder %s23, 0
      %p425 = por %p423, %p424
      %p426 = scmp.ne.s32.totalorder %s418, %s420
      %p427 = scmp.eq.s32.totalorder %s28, 1
      %p428 = por %p426, %p427
      %p429 = scmp.ne.s32.totalorder %s420, %s421
      %p430 = scmp.eq.s32.totalorder %s28, 0
      %p431 = por %p429, %p430
      %p432 = scmp.ne.s32.totalorder %s420, %s421
      %p433 = scmp.eq.s32.totalorder %s29, 1
      %p434 = por %p432, %p433
      %p436 = scmp.ne.s32.totalorder %s421, %s435
      %p437 = scmp.eq.s32.totalorder %s29, 0
      %p438 = por %p436, %p437
      %s439 = ssub.s32 %s30, %s42
      %p440 = scmp.eq.s32.totalorder %s439, 0
      %s442 = sadd.s32 %s441, 1
      %s443 = scalar_select %p440, %s441, %s442
      %p446 = pneg %p440
      %p447 = scmp.eq.s32.totalorder %s23, 1
      %p448 = por %p446, %p447
      %p449 = scmp.ne.s32.totalorder %s441, %s444
      %p450 = scmp.eq.s32.totalorder %s23, 0
      %p451 = por %p449, %p450
      %p452 = scmp.ne.s32.totalorder %s441, %s444
      %p453 = scmp.eq.s32.totalorder %s28, 1
      %p454 = por %p452, %p453
      %p455 = scmp.ne.s32.totalorder %s444, %s445
      %p456 = scmp.eq.s32.totalorder %s28, 0
      %p457 = por %p455, %p456
      %p458 = scmp.ne.s32.totalorder %s444, %s445
      %p459 = scmp.eq.s32.totalorder %s29, 1
      %p460 = por %p458, %p459
      %p462 = scmp.ne.s32.totalorder %s445, %s461
      %p463 = scmp.eq.s32.totalorder %s29, 0
      %p464 = por %p462, %p463
      %p465 = scmp.le.s32.totalorder 1, %s23
      %p466 = scmp.lt.s32.totalorder %s23, 3
      %p467 = pnand %p465, %p466
      %p468 = pneg %p467
      // Predicated region
      $region9: #{encoder_vit_forward.1} parent=5 // pred_check
        _
      $region10: #{encoder_vit_forward.1} parent=5 // pred_check_branch
        %470 = sbr.rel (%p467) target = $region12
      $region11: #{encoder_vit_forward.1} parent=5 // pred_region
        %s471 = ssub.s32 %s23, 1
        // Predicated region
        $region13: #{encoder_vit_forward.1} parent=11 // pred_check
          %p472 = pneg %p61
        $region14: #{encoder_vit_forward.1} parent=11 // pred_check_branch
          %474 = sbr.rel (%p472) target = $region16
        $region15: #{encoder_vit_forward.1} parent=11 // pred_region
          %s475 = smul.u32 2, %s32
          %p476 = scmp.lt.s32.totalorder %s475, 1
          %s477 = scalar_select %p476, %s475, 1
          %s478 = smul.addr %s477, 2
          %s479 = smul.addr %s478, 8
          %s480 = scalar_lea.vmem %s0, %s479
          %s481 = smul.u32 2, %s32
        $region16: #{encoder_vit_forward.1} parent=11 // pred_fallthru
          _
        // Predicated region
        $region17: #{encoder_vit_forward.1} parent=11 // pred_check
          %p482 = pneg %p82
        $region18: #{encoder_vit_forward.1} parent=11 // pred_check_branch
          %484 = sbr.rel (%p482) target = $region20
        $region19: #{encoder_vit_forward.1} parent=11 // pred_region
          _
        $region20: #{encoder_vit_forward.1} parent=11 // pred_fallthru
          _
        // Predicated region
        $region21: #{encoder_vit_forward.1} parent=11 // pred_check
          %p485 = pneg %p103
        $region22: #{encoder_vit_forward.1} parent=11 // pred_check_branch
          %487 = sbr.rel (%p485) target = $region24
        $region23: #{encoder_vit_forward.1} parent=11 // pred_region
          _
        $region24: #{encoder_vit_forward.1} parent=11 // pred_fallthru
          _
        // Predicated region
        $region25: #{encoder_vit_forward.1} parent=11 // pred_check
          %p488 = pneg %p410
        $region26: #{encoder_vit_forward.1} parent=11 // pred_check_branch
          %490 = sbr.rel (%p488) target = $region28
        $region27: #{encoder_vit_forward.1} parent=11 // pred_region
          _
        $region28: #{encoder_vit_forward.1} parent=11 // pred_fallthru
          _
        // Predicated region
        $region29: #{encoder_vit_forward.1} parent=11 // pred_check
          %p491 = pneg %p431
        $region30: #{encoder_vit_forward.1} parent=11 // pred_check_branch
          %493 = sbr.rel (%p491) target = $region32
        $region31: #{encoder_vit_forward.1} parent=11 // pred_region
          _
        $region32: #{encoder_vit_forward.1} parent=11 // pred_fallthru
          _
      $region12: #{encoder_vit_forward.1} parent=5 // pred_fallthru
        _
      %p494 = scmp.lt.s32.totalorder %s23, 2
      // Predicated region
      $region33: #{encoder_vit_forward.1} parent=5 // pred_check
        %p495 = pneg %p494
      $region34: #{encoder_vit_forward.1} parent=5 // pred_check_branch
        %497 = sbr.rel (%p495) target = $region36
      $region35: #{encoder_vit_forward.1} parent=5 // pred_region
        // Predicated region
        $region37: #{encoder_vit_forward.1} parent=35 // pred_check
          %p498 = pneg %p123
        $region38: #{encoder_vit_forward.1} parent=35 // pred_check_branch
          %500 = sbr.rel (%p498) target = $region40
        $region39: #{encoder_vit_forward.1} parent=35 // pred_region
          %p501 = scmp.lt.s32.totalorder %s31, 1
          %s502 = scalar_select %p501, %s31, 1
          %s503 = scalar_lea.vmem %s3, %s502
        $region40: #{encoder_vit_forward.1} parent=35 // pred_fallthru
          _
        // Predicated region
        $region41: #{encoder_vit_forward.1} parent=35 // pred_check
          %p504 = pneg %p149
        $region42: #{encoder_vit_forward.1} parent=35 // pred_check_branch
          %506 = sbr.rel (%p504) target = $region44
        $region43: #{encoder_vit_forward.1} parent=35 // pred_region
          %p507 = scmp.lt.s32.totalorder %s31, 1
          %s508 = scalar_select %p507, %s31, 1
          %s509 = scalar_lea.vmem %s4, %s508
        $region44: #{encoder_vit_forward.1} parent=35 // pred_fallthru
          _
        // Predicated region
        $region45: #{encoder_vit_forward.1} parent=35 // pred_check
          %p510 = pneg %p175
        $region46: #{encoder_vit_forward.1} parent=35 // pred_check_branch
          %512 = sbr.rel (%p510) target = $region48
        $region47: #{encoder_vit_forward.1} parent=35 // pred_region
          %p513 = scmp.lt.s32.totalorder %s31, 1
          %s514 = scalar_select %p513, %s31, 1
          %s515 = smul.addr %s514, 48
          %s516 = smul.addr %s515, 4
          %s517 = scalar_lea.vmem %s5, %s516
        $region48: #{encoder_vit_forward.1} parent=35 // pred_fallthru
          _
        // Predicated region
        $region49: #{encoder_vit_forward.1} parent=35 // pred_check
          %p518 = pneg %p201
        $region50: #{encoder_vit_forward.1} parent=35 // pred_check_branch
          %520 = sbr.rel (%p518) target = $region52
        $region51: #{encoder_vit_forward.1} parent=35 // pred_region
          %p521 = scmp.lt.s32.totalorder %s31, 1
          %s522 = scalar_select %p521, %s31, 1
          %s523 = smul.addr %s522, 16
          %s524 = smul.addr %s523, 4
          %s525 = scalar_lea.vmem %s6, %s524
        $region52: #{encoder_vit_forward.1} parent=35 // pred_fallthru
          _
        // Predicated region
        $region53: #{encoder_vit_forward.1} parent=35 // pred_check
          %p526 = pneg %p227
        $region54: #{encoder_vit_forward.1} parent=35 // pred_check_branch
          %528 = sbr.rel (%p526) target = $region56
        $region55: #{encoder_vit_forward.1} parent=35 // pred_region
          %p529 = scmp.lt.s32.totalorder %s31, 1
          %s530 = scalar_select %p529, %s31, 1
          %s531 = scalar_lea.vmem %s7, %s530
        $region56: #{encoder_vit_forward.1} parent=35 // pred_fallthru
          _
        // Predicated region
        $region57: #{encoder_vit_forward.1} parent=35 // pred_check
          %p532 = pneg %p253
        $region58: #{encoder_vit_forward.1} parent=35 // pred_check_branch
          %534 = sbr.rel (%p532) target = $region60
        $region59: #{encoder_vit_forward.1} parent=35 // pred_region
          %p535 = scmp.lt.s32.totalorder %s31, 1
          %s536 = scalar_select %p535, %s31, 1
          %s537 = scalar_lea.vmem %s8, %s536
        $region60: #{encoder_vit_forward.1} parent=35 // pred_fallthru
          _
        // Predicated region
        $region61: #{encoder_vit_forward.1} parent=35 // pred_check
          %p538 = pneg %p279
        $region62: #{encoder_vit_forward.1} parent=35 // pred_check_branch
          %540 = sbr.rel (%p538) target = $region64
        $region63: #{encoder_vit_forward.1} parent=35 // pred_region
          %p541 = scmp.lt.s32.totalorder %s31, 1
          %s542 = scalar_select %p541, %s31, 1
          %s543 = scalar_lea.vmem %s9, %s542
        $region64: #{encoder_vit_forward.1} parent=35 // pred_fallthru
          _
        // Predicated region
        $region65: #{encoder_vit_forward.1} parent=35 // pred_check
          %p544 = pneg %p305
        $region66: #{encoder_vit_forward.1} parent=35 // pred_check_branch
          %546 = sbr.rel (%p544) target = $region68
        $region67: #{encoder_vit_forward.1} parent=35 // pred_region
          %p547 = scmp.lt.s32.totalorder %s31, 1
          %s548 = scalar_select %p547, %s31, 1
          %s549 = smul.addr %s548, 32
          %s550 = smul.addr %s549, 4
          %s551 = scalar_lea.vmem %s10, %s550
        $region68: #{encoder_vit_forward.1} parent=35 // pred_fallthru
          _
        // Predicated region
        $region69: #{encoder_vit_forward.1} parent=35 // pred_check
          %p552 = pneg %p331
        $region70: #{encoder_vit_forward.1} parent=35 // pred_check_branch
          %554 = sbr.rel (%p552) target = $region72
        $region71: #{encoder_vit_forward.1} parent=35 // pred_region
          %p555 = scmp.lt.s32.totalorder %s31, 1
          %s556 = scalar_select %p555, %s31, 1
          %s557 = smul.addr %s556, 2
          %s558 = scalar_lea.vmem %s11, %s557
        $region72: #{encoder_vit_forward.1} parent=35 // pred_fallthru
          _
        // Predicated region
        $region73: #{encoder_vit_forward.1} parent=35 // pred_check
          %p559 = pneg %p357
        $region74: #{encoder_vit_forward.1} parent=35 // pred_check_branch
          %561 = sbr.rel (%p559) target = $region76
        $region75: #{encoder_vit_forward.1} parent=35 // pred_region
          %p562 = scmp.lt.s32.totalorder %s31, 1
          %s563 = scalar_select %p562, %s31, 1
          %s564 = smul.addr %s563, 32
          %s565 = smul.addr %s564, 4
          %s566 = scalar_lea.vmem %s12, %s565
        $region76: #{encoder_vit_forward.1} parent=35 // pred_fallthru
          _
        // Predicated region
        $region77: #{encoder_vit_forward.1} parent=35 // pred_check
          %p567 = pneg %p383
        $region78: #{encoder_vit_forward.1} parent=35 // pred_check_branch
          %569 = sbr.rel (%p567) target = $region80
        $region79: #{encoder_vit_forward.1} parent=35 // pred_region
          %p570 = scmp.lt.s32.totalorder %s31, 1
          %s571 = scalar_select %p570, %s31, 1
          %s572 = scalar_lea.vmem %s13, %s571
        $region80: #{encoder_vit_forward.1} parent=35 // pred_fallthru
          _
      $region36: #{encoder_vit_forward.1} parent=5 // pred_fallthru
        _
      %p573 = scmp.le.s32.totalorder 1, %s23
      %p574 = scmp.lt.s32.totalorder %s23, 3
      %p575 = pnand %p573, %p574
      %p576 = pneg %p575
      // Predicated region
      $region81: #{encoder_vit_forward.1} parent=5 // pred_check
        _
      $region82: #{encoder_vit_forward.1} parent=5 // pred_check_branch
        %578 = sbr.rel (%p575) target = $region84
      $region83: #{encoder_vit_forward.1} parent=5 // pred_region
        %s579 = ssub.s32 %s23, 1
        %s580 = smul.u32 2, %s32
        %p581 = scmp.lt.s32.totalorder %s580, 1
        %s582 = scalar_select %p581, %s580, 1
        %s583 = smul.addr %s582, 2
        %s584 = smul.addr %s583, 8
        %s585 = scalar_lea.vmem %s0, %s584
        %p586 = pneg %p61
        %p587 = pneg %p58
        %p588 = pneg %p82
        %p589 = pneg %p79
        %p590 = pneg %p103
        %p591 = pneg %p100
        %p592 = scmp.lt.s32.totalorder %s33, 1
        %s593 = scalar_select %p592, %s33, 1
        %s594 = scalar_lea.vmem %s3, %s593
        %p595 = pneg %p129
        %p596 = pneg %p126
        %p597 = scmp.lt.s32.totalorder %s33, 1
        %s598 = scalar_select %p597, %s33, 1
        %s599 = scalar_lea.vmem %s4, %s598
        %p600 = pneg %p155
        %p601 = pneg %p152
        %p602 = scmp.lt.s32.totalorder %s33, 1
        %s603 = scalar_select %p602, %s33, 1
        %s604 = smul.addr %s603, 48
        %s605 = smul.addr %s604, 4
        %s606 = scalar_lea.vmem %s5, %s605
        %p607 = pneg %p181
        %p608 = pneg %p178
        %p609 = scmp.lt.s32.totalorder %s33, 1
        %s610 = scalar_select %p609, %s33, 1
        %s611 = smul.addr %s610, 16
        %s612 = smul.addr %s611, 4
        %s613 = scalar_lea.vmem %s6, %s612
        %p614 = pneg %p207
        %p615 = pneg %p204
        %p616 = scmp.lt.s32.totalorder %s33, 1
        %s617 = scalar_select %p616, %s33, 1
        %s618 = scalar_lea.vmem %s7, %s617
        %p619 = pneg %p233
        %p620 = pneg %p230
        %p621 = scmp.lt.s32.totalorder %s33, 1
        %s622 = scalar_select %p621, %s33, 1
        %s623 = scalar_lea.vmem %s8, %s622
        %p624 = pneg %p259
        %p625 = pneg %p256
        %p626 = scmp.lt.s32.totalorder %s33, 1
        %s627 = scalar_select %p626, %s33, 1
        %s628 = scalar_lea.vmem %s9, %s627
        %p629 = pneg %p285
        %p630 = pneg %p282
        %p631 = scmp.lt.s32.totalorder %s33, 1
        %s632 = scalar_select %p631, %s33, 1
        %s633 = smul.addr %s632, 32
        %s634 = smul.addr %s633, 4
        %s635 = scalar_lea.vmem %s10, %s634
        %p636 = pneg %p311
        %p637 = pneg %p308
        %p638 = scmp.lt.s32.totalorder %s33, 1
        %s639 = scalar_select %p638, %s33, 1
        %s640 = smul.addr %s639, 2
        %s641 = scalar_lea.vmem %s11, %s640
        %p642 = pneg %p337
        %p643 = pneg %p334
        %p644 = scmp.lt.s32.totalorder %s33, 1
        %s645 = scalar_select %p644, %s33, 1
        %s646 = smul.addr %s645, 32
        %s647 = smul.addr %s646, 4
        %s648 = scalar_lea.vmem %s12, %s647
        %p649 = pneg %p363
        %p650 = pneg %p360
        %p651 = scmp.lt.s32.totalorder %s33, 1
        %s652 = scalar_select %p651, %s33, 1
        %s653 = scalar_lea.vmem %s13, %s652
        %p654 = pneg %p389
        %p655 = pneg %p386
        %p656 = pneg %p410
        %p657 = pneg %p407
        %p658 = pneg %p431
        %p659 = pneg %p428
        %p660 = pneg %p457
        %p661 = pneg %p454
        %s662 = smul.u32 2, %s32
        %p663 = scmp.lt.s32.totalorder %s662, 1
        %s664 = scalar_select %p663, %s662, 1
        %s665 = smul.addr %s664, 2
        %s666 = smul.addr %s665, 8
        %s667 = scalar_lea.vmem %s0, %s666
        %s668 = smul.u32 2, %s32
        %p669 = scmp.lt.s32.totalorder %s33, 1
        %s670 = scalar_select %p669, %s33, 1
        %s671 = scalar_lea.vmem %s3, %s670
        %p672 = scmp.lt.s32.totalorder %s33, 1
        %s673 = scalar_select %p672, %s33, 1
        %s674 = scalar_lea.vmem %s4, %s673
        %p675 = scmp.lt.s32.totalorder %s33, 1
        %s676 = scalar_select %p675, %s33, 1
        %s677 = smul.addr %s676, 48
        %s678 = smul.addr %s677, 4
        %s679 = scalar_lea.vmem %s5, %s678
        %p680 = scmp.lt.s32.totalorder %s33, 1
        %s681 = scalar_select %p680, %s33, 1
        %s682 = smul.addr %s681, 16
        %s683 = smul.addr %s682, 4
        %s684 = scalar_lea.vmem %s6, %s683
        %p685 = scmp.lt.s32.totalorder %s33, 1
        %s686 = scalar_select %p685, %s33, 1
        %s687 = scalar_lea.vmem %s7, %s686
        %p688 = scmp.lt.s32.totalorder %s33, 1
        %s689 = scalar_select %p688, %s33, 1
        %s690 = scalar_lea.vmem %s8, %s689
        %p691 = scmp.lt.s32.totalorder %s33, 1
        %s692 = scalar_select %p691, %s33, 1
        %s693 = scalar_lea.vmem %s9, %s692
        %p694 = scmp.lt.s32.totalorder %s33, 1
        %s695 = scalar_select %p694, %s33, 1
        %s696 = smul.addr %s695, 32
        %s697 = smul.addr %s696, 4
        %s698 = scalar_lea.vmem %s10, %s697
        %p699 = scmp.lt.s32.totalorder %s33, 1
        %s700 = scalar_select %p699, %s33, 1
        %s701 = smul.addr %s700, 2
        %s702 = scalar_lea.vmem %s11, %s701
        %p703 = scmp.lt.s32.totalorder %s33, 1
        %s704 = scalar_select %p703, %s33, 1
        %s705 = smul.addr %s704, 32
        %s706 = smul.addr %s705, 4
        %s707 = scalar_lea.vmem %s12, %s706
        %p708 = scmp.lt.s32.totalorder %s33, 1
        %s709 = scalar_select %p708, %s33, 1
        %s710 = scalar_lea.vmem %s13, %s709
        %s711 = smul.u32 2, %s32
        %p713 = scmp.eq.s32.totalorder %s33, 0
        // Predicated region
        $region85: #{encoder_vit_forward.1} parent=83 // pred_check
          %p714 = pneg %p713
        $region86: #{encoder_vit_forward.1} parent=83 // pred_check_branch
          %716 = sbr.rel (%p714) target = $region88
        $region87: #{encoder_vit_forward.1} parent=83 // pred_region
          %v717 = vld [vmem:[%s667] sm:$0xff]
          %v718 = vld [vmem:[%s667 + $0x8] sm:$0xff]
          %v719 = vld [vmem:[%s667 + $0x10] sm:$0xff]
          %v720 = vld [vmem:[%s667 + $0x18] sm:$0xff]
          %v721 = vpack.c.bf16 %v718, %v717
          %v722 = vpack.c.bf16 %v720, %v719
          %v723 = vld [vmem:[%s1] sm:$0xf]
          %v724 = vld [vmem:[%s1 + $0x4] sm:$0xf]
          %v725 = vld [vmem:[%s1 + $0x8] sm:$0xf]
          %v726 = vld [vmem:[%s1 + $0xc] sm:$0xf]
          %v727 = vld [vmem:[%s1 + $0x10] sm:$0xf]
          %v728 = vld [vmem:[%s1 + $0x14] sm:$0xf]
          %v729 = vld [vmem:[%s1 + $0x18] sm:$0xf]
          %v730 = vld [vmem:[%s1 + $0x1c] sm:$0xf]
          %v731 = vld [vmem:[%s1 + $0x20] sm:$0xf]
          %v732 = vld [vmem:[%s1 + $0x24] sm:$0xf]
          %v733 = vld [vmem:[%s1 + $0x28] sm:$0xf]
          %v734 = vld [vmem:[%s1 + $0x2c] sm:$0xf]
          %v735 = vld [vmem:[%s1 + $0x30] sm:$0xf]
          %v736 = vld [vmem:[%s1 + $0x34] sm:$0xf]
          %v737 = vld [vmem:[%s1 + $0x38] sm:$0xf]
          %v738 = vld [vmem:[%s1 + $0x3c] sm:$0xf]
          %v755 = vunpack.c.l.b16 %v723
          %v756 = vunpack.c.l.b16 %v724
          %v757 = vunpack.c.l.b16 %v725
          %v758 = vunpack.c.l.b16 %v726
          %v759 = vunpack.c.l.b16 %v727
          %v760 = vunpack.c.l.b16 %v728
          %v761 = vunpack.c.l.b16 %v729
          %v762 = vunpack.c.l.b16 %v730
          %v763 = vunpack.c.l.b16 %v731
          %v764 = vunpack.c.l.b16 %v732
          %v765 = vunpack.c.l.b16 %v733
          %v766 = vunpack.c.l.b16 %v734
          %v767 = vunpack.c.l.b16 %v735
          %v768 = vunpack.c.l.b16 %v736
          %v769 = vunpack.c.l.b16 %v737
          %v770 = vunpack.c.l.b16 %v738
          %v771 = vpack.c.b16 %v756, %v755
          %v772 = vpack.c.b16 %v758, %v757
          %v773 = vpack.c.b16 %v760, %v759
          %v774 = vpack.c.b16 %v762, %v761
          %v775 = vpack.c.b16 %v764, %v763
          %v776 = vpack.c.b16 %v766, %v765
          %v777 = vpack.c.b16 %v768, %v767
          %v778 = vpack.c.b16 %v770, %v769
          %787 = vmatprep.subr.bf16.mxu0 0
          %788 = vmatpush1.bf16.msra.mxu0 %v771
          %789 = vmatprep.subr.bf16.mxu0 0
          %790 = vmatpush1.bf16.msra.mxu0 %v772
          %791 = vmatprep.subr.bf16.mxu0 0
          %792 = vmatpush1.bf16.msra.mxu0 %v773
          %793 = vmatprep.subr.bf16.mxu0 0
          %794 = vmatpush1.bf16.msra.mxu0 %v774
          %795 = vmatprep.subr.bf16.mxu0 0
          %796 = vmatpush1.bf16.msra.mxu0 %v775
          %797 = vmatprep.subr.bf16.mxu0 0
          %798 = vmatpush1.bf16.msra.mxu0 %v776
          %799 = vmatprep.subr.bf16.mxu0 0
          %800 = vmatpush1.bf16.msra.mxu0 %v777
          %801 = vmatprep.subr.bf16.mxu0 0
          %802 = vmatpush1.bf16.msra.mxu0 %v778
          %803 = vmatprep.subr.bf16.mxu0 0
          %804 = vmatpush1.bf16.msra.mxu0 0
          %805 = vmatprep.subr.bf16.mxu0 0
          %806 = vmatpush1.bf16.msra.mxu0 0
          %807 = vmatprep.subr.bf16.mxu0 0
          %808 = vmatpush1.bf16.msra.mxu0 0
          %809 = vmatprep.subr.bf16.mxu0 0
          %810 = vmatpush1.bf16.msra.mxu0 0
          %811 = vmatprep.subr.bf16.mxu0 0
          %812 = vmatpush1.bf16.msra.mxu0 0
          %813 = vmatprep.subr.bf16.mxu0 0
          %814 = vmatpush1.bf16.msra.mxu0 0
          %815 = vmatprep.subr.bf16.mxu0 0
          %816 = vmatpush1.bf16.msra.mxu0 0
          %817 = vmatprep.subr.bf16.mxu0 0
          %818 = vmatpush1.bf16.msra.mxu0 0
          %819 = vmatprep.mubr.bf16.mxu0 0
          %820 = vmatmul.mubr.bf16.gmra.mrb[0].mxu0 %v721
          %v821 = vpop.f32.mrb[0].mxu0
          %v822 = vadd.f32 0.0, %v821
          %v823 = vpop.f32.mrb[0].mxu0
          %v824 = vpop.f32.mrb[0].mxu0
          %v825 = vadd.f32 0.0, %v824
          %v826 = vpop.f32.mrb[0].mxu0
          %827 = vmatprep.mubr.bf16.mxu0 0
          %828 = vmatmul.mubr.bf16.gmra.mrb[0].mxu0 %v722
          %v829 = vpop.f32.mrb[0].mxu0
          %v830 = vadd.f32 0.0, %v829
          %v831 = vpop.f32.mrb[0].mxu0
          %v832 = vpop.f32.mrb[0].mxu0
          %v833 = vadd.f32 0.0, %v832
          %v834 = vpop.f32.mrb[0].mxu0
          %835 = vdwg.mxu0
          %v836 = vld [vmem:[%s2] sm:$0xff]
          %v837 = vld [vmem:[%s2 + $0x8] sm:$0xff]
          %v838 = vadd.f32 %v822, %v836
          %v839 = vadd.f32 %v825, %v837
          %v840 = vadd.f32 %v830, %v836
          %v841 = vadd.f32 %v833, %v837
          %842 = vst [vmem:[#allocation2] sm:$0xff] %v838
          %843 = vst [vmem:[#allocation2 + $0x8] sm:$0xff] %v839
          %844 = vst [vmem:[#allocation2 + $0x10] sm:$0xff] %v840
          %845 = vst [vmem:[#allocation2 + $0x18] sm:$0xff] %v841
        $region88: #{encoder_vit_forward.1} parent=83 // pred_fallthru
          _
        %v846 = vld [vmem:[#allocation2] sm:$0xff]
        %v847 = vld [vmem:[#allocation2 + $0x8] sm:$0xff]
        %v848 = vld [vmem:[#allocation2 + $0x10] sm:$0xff]
        %v849 = vld [vmem:[#allocation2 + $0x18] sm:$0xff]
        %v850 = vld [vmem:[%s671] sm:$0x1]
        %v851 = vld [vmem:[%s674] sm:$0x1]
        %852 = vadd.xlane.f32.xlu0 %v846
        %v853 = vpop.xlane.xlu0 %852
        %854 = vadd.xlane.f32.xlu0 %v847
        %v855 = vpop.xlane.xlu0 %854
        %856 = vadd.xlane.f32.xlu0 %v848
        %v857 = vpop.xlane.xlu0 %856
        %858 = vadd.xlane.f32.xlu0 %v849
        %v859 = vpop.xlane.xlu0 %858
        %v860 = vrcp.pop 128.0
        %v861 = vmul.f32 %v853, %v860
        %v862 = vmul.f32 %v855, %v860
        %v863 = vmul.f32 %v857, %v860
        %v864 = vmul.f32 %v859, %v860
        %v865 = vsub.f32 %v846, %v861
        %v866 = vsub.f32 %v847, %v862
        %v867 = vsub.f32 %v848, %v863
        %v868 = vsub.f32 %v849, %v864
        %v869 = vmul.f32 %v865, %v865
        %v870 = vmul.f32 %v866, %v866
        %v871 = vmul.f32 %v867, %v867
        %v872 = vmul.f32 %v868, %v868
        %873 = vadd.xlane.f32.xlu0 %v869
        %v874 = vpop.xlane.xlu0 %873
        %875 = vadd.xlane.f32.xlu0 %v870
        %v876 = vpop.xlane.xlu0 %875
        %877 = vadd.xlane.f32.xlu0 %v871
        %v878 = vpop.xlane.xlu0 %877
        %879 = vadd.xlane.f32.xlu0 %v872
        %v880 = vpop.xlane.xlu0 %879
        %v881 = vmul.f32 %v874, %v860
        %v882 = vmul.f32 %v876, %v860
        %v883 = vmul.f32 %v878, %v860
        %v884 = vmul.f32 %v880, %v860
        %v885 = vadd.f32 %v881, 1e-05
        %v886 = vadd.f32 %v882, 1e-05
        %v887 = vadd.f32 %v883, 1e-05
        %v888 = vadd.f32 %v884, 1e-05
        %v889 = vrsqrt.pop %v885
        %v890 = vrsqrt.pop %v886
        %v891 = vrsqrt.pop %v887
        %v892 = vrsqrt.pop %v888
        %v893 = vmul.f32 %v865, %v889
        %v894 = vmul.f32 %v866, %v890
        %v895 = vmul.f32 %v867, %v891
        %v896 = vmul.f32 %v868, %v892
        %v898 = vlaneseq
        %v899 = vshrl.u32 %v898, 7
        %v900 = vsub.s32 0, %v899
        %v901 = vrot.slane %v850, %v900
        %v903 = vmul.f32 %v893, %v901
        %v904 = vmul.f32 %v894, %v901
        %v905 = vmul.f32 %v895, %v901
        %v906 = vmul.f32 %v896, %v901
        %v908 = vlaneseq
        %v909 = vshrl.u32 %v908, 7
        %v910 = vsub.s32 0, %v909
        %v911 = vrot.slane %v851, %v910
        %v913 = vadd.f32 %v903, %v911
        %v914 = vadd.f32 %v904, %v911
        %v915 = vadd.f32 %v905, %v911
        %v916 = vadd.f32 %v906, %v911
        %v917 = vpack.c.bf16 %v914, %v913
        %v918 = vpack.c.bf16 %v916, %v915
        %v919 = vld [vmem:[%s679] sm:$0xff]
        %v920 = vld [vmem:[%s679 + $0x8] sm:$0xf]
        %v921 = vld [vmem:[%s679 + $0xc] sm:$0xff]
        %v922 = vld [vmem:[%s679 + $0x14] sm:$0xf]
        %v923 = vld [vmem:[%s679 + $0x18] sm:$0xff]
        %v924 = vld [vmem:[%s679 + $0x20] sm:$0xf]
        %v925 = vld [vmem:[%s679 + $0x24] sm:$0xff]
        %v926 = vld [vmem:[%s679 + $0x2c] sm:$0xf]
        %v927 = vld [vmem:[%s679 + $0x30] sm:$0xff]
        %v928 = vld [vmem:[%s679 + $0x38] sm:$0xf]
        %v929 = vld [vmem:[%s679 + $0x3c] sm:$0xff]
        %v930 = vld [vmem:[%s679 + $0x44] sm:$0xf]
        %v931 = vld [vmem:[%s679 + $0x48] sm:$0xff]
        %v932 = vld [vmem:[%s679 + $0x50] sm:$0xf]
        %v933 = vld [vmem:[%s679 + $0x54] sm:$0xff]
        %v934 = vld [vmem:[%s679 + $0x5c] sm:$0xf]
        %v935 = vld [vmem:[%s679 + $0x60] sm:$0xff]
        %v936 = vld [vmem:[%s679 + $0x68] sm:$0xf]
        %v937 = vld [vmem:[%s679 + $0x6c] sm:$0xff]
        %v938 = vld [vmem:[%s679 + $0x74] sm:$0xf]
        %v939 = vld [vmem:[%s679 + $0x78] sm:$0xff]
        %v940 = vld [vmem:[%s679 + $0x80] sm:$0xf]
        %v941 = vld [vmem:[%s679 + $0x84] sm:$0xff]
        %v942 = vld [vmem:[%s679 + $0x8c] sm:$0xf]
        %v943 = vld [vmem:[%s679 + $0x90] sm:$0xff]
        %v944 = vld [vmem:[%s679 + $0x98] sm:$0xf]
        %v945 = vld [vmem:[%s679 + $0x9c] sm:$0xff]
        %v946 = vld [vmem:[%s679 + $0xa4] sm:$0xf]
        %v947 = vld [vmem:[%s679 + $0xa8] sm:$0xff]
        %v948 = vld [vmem:[%s679 + $0xb0] sm:$0xf]
        %v949 = vld [vmem:[%s679 + $0xb4] sm:$0xff]
        %v950 = vld [vmem:[%s679 + $0xbc] sm:$0xf]
        %v983 = vunpack.c.l.b16 %v919
        %v984 = vunpack.c.h.b16 %v919
        %v985 = vunpack.c.l.b16 %v920
        %v986 = vunpack.c.l.b16 %v921
        %v987 = vunpack.c.h.b16 %v921
        %v988 = vunpack.c.l.b16 %v922
        %v989 = vunpack.c.l.b16 %v923
        %v990 = vunpack.c.h.b16 %v923
        %v991 = vunpack.c.l.b16 %v924
        %v992 = vunpack.c.l.b16 %v925
        %v993 = vunpack.c.h.b16 %v925
        %v994 = vunpack.c.l.b16 %v926
        %v995 = vunpack.c.l.b16 %v927
        %v996 = vunpack.c.h.b16 %v927
        %v997 = vunpack.c.l.b16 %v928
        %v998 = vunpack.c.l.b16 %v929
        %v999 = vunpack.c.h.b16 %v929
        %v1000 = vunpack.c.l.b16 %v930
        %v1001 = vunpack.c.l.b16 %v931
        %v1002 = vunpack.c.h.b16 %v931
        %v1003 = vunpack.c.l.b16 %v932
        %v1004 = vunpack.c.l.b16 %v933
        %v1005 = vunpack.c.h.b16 %v933
        %v1006 = vunpack.c.l.b16 %v934
        %v1007 = vunpack.c.l.b16 %v935
        %v1008 = vunpack.c.h.b16 %v935
        %v1009 = vunpack.c.l.b16 %v936
        %v1010 = vunpack.c.l.b16 %v937
        %v1011 = vunpack.c.h.b16 %v937
        %v1012 = vunpack.c.l.b16 %v938
        %v1013 = vunpack.c.l.b16 %v939
        %v1014 = vunpack.c.h.b16 %v939
        %v1015 = vunpack.c.l.b16 %v940
        %v1016 = vunpack.c.l.b16 %v941
        %v1017 = vunpack.c.h.b16 %v941
        %v1018 = vunpack.c.l.b16 %v942
        %v1019 = vunpack.c.l.b16 %v943
        %v1020 = vunpack.c.h.b16 %v943
        %v1021 = vunpack.c.l.b16 %v944
        %v1022 = vunpack.c.l.b16 %v945
        %v1023 = vunpack.c.h.b16 %v945
        %v1024 = vunpack.c.l.b16 %v946
        %v1025 = vunpack.c.l.b16 %v947
        %v1026 = vunpack.c.h.b16 %v947
        %v1027 = vunpack.c.l.b16 %v948
        %v1028 = vunpack.c.l.b16 %v949
        %v1029 = vunpack.c.h.b16 %v949
        %v1030 = vunpack.c.l.b16 %v950
        %v1031 = vpack.c.b16 %v986, %v983
        %v1032 = vpack.c.b16 %v987, %v984
        %v1033 = vpack.c.b16 %v988, %v985
        %v1034 = vpack.c.b16 %v992, %v989
        %v1035 = vpack.c.b16 %v993, %v990
        %v1036 = vpack.c.b16 %v994, %v991
        %v1037 = vpack.c.b16 %v998, %v995
        %v1038 = vpack.c.b16 %v999, %v996
        %v1039 = vpack.c.b16 %v1000, %v997
        %v1040 = vpack.c.b16 %v1004, %v1001
        %v1041 = vpack.c.b16 %v1005, %v1002
        %v1042 = vpack.c.b16 %v1006, %v1003
        %v1043 = vpack.c.b16 %v1010, %v1007
        %v1044 = vpack.c.b16 %v1011, %v1008
        %v1045 = vpack.c.b16 %v1012, %v1009
        %v1046 = vpack.c.b16 %v1016, %v1013
        %v1047 = vpack.c.b16 %v1017, %v1014
        %v1048 = vpack.c.b16 %v1018, %v1015
        %v1049 = vpack.c.b16 %v1022, %v1019
        %v1050 = vpack.c.b16 %v1023, %v1020
        %v1051 = vpack.c.b16 %v1024, %v1021
        %v1052 = vpack.c.b16 %v1028, %v1025
        %v1053 = vpack.c.b16 %v1029, %v1026
        %v1054 = vpack.c.b16 %v1030, %v1027
        %1079 = vmatprep.subr.bf16.mxu0 %v1032
        %1080 = vmatpush1.bf16.msra.mxu0 %v1031
        %1081 = vmatprep.subr.bf16.mxu0 %v1035
        %1082 = vmatpush1.bf16.msra.mxu0 %v1034
        %1083 = vmatprep.subr.bf16.mxu0 %v1038
        %1084 = vmatpush1.bf16.msra.mxu0 %v1037
        %1085 = vmatprep.subr.bf16.mxu0 %v1041
        %1086 = vmatpush1.bf16.msra.mxu0 %v1040
        %1087 = vmatprep.subr.bf16.mxu0 %v1044
        %1088 = vmatpush1.bf16.msra.mxu0 %v1043
        %1089 = vmatprep.subr.bf16.mxu0 %v1047
        %1090 = vmatpush1.bf16.msra.mxu0 %v1046
        %1091 = vmatprep.subr.bf16.mxu0 %v1050
        %1092 = vmatpush1.bf16.msra.mxu0 %v1049
        %1093 = vmatprep.subr.bf16.mxu0 %v1053
        %1094 = vmatpush1.bf16.msra.mxu0 %v1052
        %1095 = vmatprep.subr.bf16.mxu0 0
        %1096 = vmatpush1.bf16.msra.mxu0 0
        %1097 = vmatprep.subr.bf16.mxu0 0
        %1098 = vmatpush1.bf16.msra.mxu0 0
        %1099 = vmatprep.subr.bf16.mxu0 0
        %1100 = vmatpush1.bf16.msra.mxu0 0
        %1101 = vmatprep.subr.bf16.mxu0 0
        %1102 = vmatpush1.bf16.msra.mxu0 0
        %1103 = vmatprep.subr.bf16.mxu0 0
        %1104 = vmatpush1.bf16.msra.mxu0 0
        %1105 = vmatprep.subr.bf16.mxu0 0
        %1106 = vmatpush1.bf16.msra.mxu0 0
        %1107 = vmatprep.subr.bf16.mxu0 0
        %1108 = vmatpush1.bf16.msra.mxu0 0
        %1109 = vmatprep.subr.bf16.mxu0 0
        %1110 = vmatpush1.bf16.msra.mxu0 0
        %1111 = vmatprep.mubr.bf16.mxu0 0
        %1112 = vmatmul.mubr.bf16.gmra.mrb[0].mxu0 %v917
        %v1113 = vpop.f32.mrb[0].mxu0
        %v1114 = vadd.f32 0.0, %v1113
        %v1115 = vpop.f32.mrb[0].mxu0
        %v1116 = vadd.f32 0.0, %v1115
        %v1117 = vpop.f32.mrb[0].mxu0
        %v1118 = vadd.f32 0.0, %v1117
        %v1119 = vpop.f32.mrb[0].mxu0
        %v1120 = vadd.f32 0.0, %v1119
        %1121 = vmatprep.mubr.bf16.mxu0 0
        %1122 = vmatmul.mubr.bf16.gmra.mrb[0].mxu0 %v918
        %v1123 = vpop.f32.mrb[0].mxu0
        %v1124 = vadd.f32 0.0, %v1123
        %v1125 = vpop.f32.mrb[0].mxu0
        %v1126 = vadd.f32 0.0, %v1125
        %v1127 = vpop.f32.mrb[0].mxu0
        %v1128 = vadd.f32 0.0, %v1127
        %v1129 = vpop.f32.mrb[0].mxu0
        %v1130 = vadd.f32 0.0, %v1129
        %1131 = vdwg.mxu0
        %1132 = vmatprep.subr.bf16.mxu0 0
        %1133 = vmatpush1.bf16.msra.mxu0 %v1033
        %1134 = vmatprep.subr.bf16.mxu0 0
        %1135 = vmatpush1.bf16.msra.mxu0 %v1036
        %1136 = vmatprep.subr.bf16.mxu0 0
        %1137 = vmatpush1.bf16.msra.mxu0 %v1039
        %1138 = vmatprep.subr.bf16.mxu0 0
        %1139 = vmatpush1.bf16.msra.mxu0 %v1042
        %1140 = vmatprep.subr.bf16.mxu0 0
        %1141 = vmatpush1.bf16.msra.mxu0 %v1045
        %1142 = vmatprep.subr.bf16.mxu0 0
        %1143 = vmatpush1.bf16.msra.mxu0 %v1048
        %1144 = vmatprep.subr.bf16.mxu0 0
        %1145 = vmatpush1.bf16.msra.mxu0 %v1051
        %1146 = vmatprep.subr.bf16.mxu0 0
        %1147 = vmatpush1.bf16.msra.mxu0 %v1054
        %1148 = vmatprep.subr.bf16.mxu0 0
        %1149 = vmatpush1.bf16.msra.mxu0 0
        %1150 = vmatprep.subr.bf16.mxu0 0
        %1151 = vmatpush1.bf16.msra.mxu0 0
        %1152 = vmatprep.subr.bf16.mxu0 0
        %1153 = vmatpush1.bf16.msra.mxu0 0
        %1154 = vmatprep.subr.bf16.mxu0 0
        %1155 = vmatpush1.bf16.msra.mxu0 0
        %1156 = vmatprep.subr.bf16.mxu0 0
        %1157 = vmatpush1.bf16.msra.mxu0 0
        %1158 = vmatprep.subr.bf16.mxu0 0
        %1159 = vmatpush1.bf16.msra.mxu0 0
        %1160 = vmatprep.subr.bf16.mxu0 0
        %1161 = vmatpush1.bf16.msra.mxu0 0
        %1162 = vmatprep.subr.bf16.mxu0 0
        %1163 = vmatpush1.bf16.msra.mxu0 0
        %1164 = vmatprep.mubr.bf16.mxu0 0
        %1165 = vmatmul.mubr.bf16.gmra.mrb[0].mxu0 %v917
        %v1166 = vpop.f32.mrb[0].mxu0
        %v1167 = vadd.f32 0.0, %v1166
        %v1168 = vpop.f32.mrb[0].mxu0
        %v1169 = vpop.f32.mrb[0].mxu0
        %v1170 = vadd.f32 0.0, %v1169
        %v1171 = vpop.f32.mrb[0].mxu0
        %1172 = vmatprep.mubr.bf16.mxu0 0
        %1173 = vmatmul.mubr.bf16.gmra.mrb[0].mxu0 %v918
        %v1174 = vpop.f32.mrb[0].mxu0
        %v1175 = vadd.f32 0.0, %v1174
        %v1176 = vpop.f32.mrb[0].mxu0
        %v1177 = vpop.f32.mrb[0].mxu0
        %v1178 = vadd.f32 0.0, %v1177
        %v1179 = vpop.f32.mrb[0].mxu0
        %1180 = vdwg.mxu0
        %v1181 = vpack.c.bf16 %v1118, %v1114
        %v1182 = vpack.c.bf16 %v1120, %v1116
        %v1183 = vpack.c.bf16 %v1170, %v1167
        %v1184 = vpack.c.bf16 %v1128, %v1124
        %v1185 = vpack.c.bf16 %v1130, %v1126
        %v1186 = vpack.c.bf16 %v1178, %v1175
        %vm1187 = vcmask 523264
        %v1189 = vsel %vm1187, %v1181, 0
        %v1192 = vsel %vm1187, %v1182, 0
        %1194 = vmatprep.subr.bf16.mxu0 0
        %1195 = vmatpush1.bf16.xpose.msra.mxu0 %v1192
        %1196 = vmatprep.subr.bf16.mxu0 0
        %1197 = vmatpush1.bf16.xpose.msra.mxu0 0
        %1198 = vmatprep.subr.bf16.mxu0 0
        %1199 = vmatpush1.bf16.xpose.msra.mxu0 0
        %1200 = vmatprep.subr.bf16.mxu0 0
        %1201 = vmatpush1.bf16.xpose.msra.mxu0 0
        %1202 = vmatprep.subr.bf16.mxu0 0
        %1203 = vmatpush1.bf16.xpose.msra.mxu0 0
        %1204 = vmatprep.subr.bf16.mxu0 0
        %1205 = vmatpush1.bf16.xpose.msra.mxu0 0
        %1206 = vmatprep.subr.bf16.mxu0 0
        %1207 = vmatpush1.bf16.xpose.msra.mxu0 0
        %1208 = vmatprep.subr.bf16.mxu0 0
        %1209 = vmatpush1.bf16.xpose.msra.mxu0 0
        %1210 = vmatprep.subr.bf16.mxu0 0
        %1211 = vmatpush1.bf16.xpose.msra.mxu0 0
        %1212 = vmatprep.subr.bf16.mxu0 0
        %1213 = vmatpush1.bf16.xpose.msra.mxu0 0
        %1214 = vmatprep.subr.bf16.mxu0 0
        %1215 = vmatpush1.bf16.xpose.msra.mxu0 0
        %1216 = vmatprep.subr.bf16.mxu0 0
        %1217 = vmatpush1.bf16.xpose.msra.mxu0 0
        %1218 = vmatprep.subr.bf16.mxu0 0
        %1219 = vmatpush1.bf16.xpose.msra.mxu0 0
        %1220 = vmatprep.subr.bf16.mxu0 0
        %1221 = vmatpush1.bf16.xpose.msra.mxu0 0
        %1222 = vmatprep.subr.bf16.mxu0 0
        %1223 = vmatpush1.bf16.xpose.msra.mxu0 0
        %1224 = vmatprep.subr.bf16.mxu0 0
        %1225 = vmatpush1.bf16.xpose.msra.mxu0 0
        %1226 = vmatprep.mubr.bf16.mxu0 0
        %1227 = vmatmul.mubr.bf16.gmra.mrb[0].mxu0 %v1189
        %v1228 = vpop.f32.mrb[0].mxu0
        %v1229 = vadd.f32 0.0, %v1228
        %v1230 = vpop.f32.mrb[0].mxu0
        %v1231 = vpop.f32.mrb[0].mxu0
        %v1232 = vadd.f32 0.0, %v1231
        %v1233 = vpop.f32.mrb[0].mxu0
        %1234 = vdwg.mxu0
        %vm1235 = vcmask 130048
        %v1236 = vsel %vm1235, %v1229, -inf
        %1237 = vmax.xlane.f32.xlu0 %v1236
        %v1238 = vpop.xlane.xlu0 %1237
        %v1239 = vsel %vm1235, %v1232, -inf
        %1240 = vmax.xlane.f32.xlu0 %v1239
        %v1241 = vpop.xlane.xlu0 %1240
        %v1242 = vsub.f32 %v1229, %v1238
        %v1243 = vsub.f32 %v1232, %v1241
        %v1244 = vmul.f32 %v1242, 1.442695
        %v1245 = vpow.pop %v1244
        %v1246 = vmul.f32 %v1243, 1.442695
        %v1247 = vpow.pop %v1246
        %v1248 = vsel %vm1235, %v1245, 0.0
        %1249 = vadd.xlane.f32.xlu0 %v1248
        %v1250 = vpop.xlane.xlu0 %1249
        %v1251 = vsel %vm1235, %v1247, 0.0
        %1252 = vadd.xlane.f32.xlu0 %v1251
        %v1253 = vpop.xlane.xlu0 %1252
        %v1254 = vrcp.pop %v1250
        %v1255 = vrcp.pop %v1253
        %v1256 = vmul.f32 %v1245, %v1254
        %v1257 = vmul.f32 %v1247, %v1255
        %v1258 = vpack.c.bf16 %v1257, %v1256
        %v1260 = vsel %vm1235, %v1258, 0
        %1262 = vmatprep.subr.bf16.mxu0 0
        %1263 = vmatpush1.bf16.msra.mxu0 %v1183
        %1264 = vmatprep.subr.bf16.mxu0 0
        %1265 = vmatpush1.bf16.msra.mxu0 0
        %1266 = vmatprep.subr.bf16.mxu0 0
        %1267 = vmatpush1.bf16.msra.mxu0 0
        %1268 = vmatprep.subr.bf16.mxu0 0
        %1269 = vmatpush1.bf16.msra.mxu0 0
        %1270 = vmatprep.subr.bf16.mxu0 0
        %1271 = vmatpush1.bf16.msra.mxu0 0
        %1272 = vmatprep.subr.bf16.mxu0 0
        %1273 = vmatpush1.bf16.msra.mxu0 0
        %1274 = vmatprep.subr.bf16.mxu0 0
        %1275 = vmatpush1.bf16.msra.mxu0 0
        %1276 = vmatprep.subr.bf16.mxu0 0
        %1277 = vmatpush1.bf16.msra.mxu0 0
        %1278 = vmatprep.subr.bf16.mxu0 0
        %1279 = vmatpush1.bf16.msra.mxu0 0
        %1280 = vmatprep.subr.bf16.mxu0 0
        %1281 = vmatpush1.bf16.msra.mxu0 0
        %1282 = vmatprep.subr.bf16.mxu0 0
        %1283 = vmatpush1.bf16.msra.mxu0 0
        %1284 = vmatprep.subr.bf16.mxu0 0
        %1285 = vmatpush1.bf16.msra.mxu0 0
        %1286 = vmatprep.subr.bf16.mxu0 0
        %1287 = vmatpush1.bf16.msra.mxu0 0
        %1288 = vmatprep.subr.bf16.mxu0 0
        %1289 = vmatpush1.bf16.msra.mxu0 0
        %1290 = vmatprep.subr.bf16.mxu0 0
        %1291 = vmatpush1.bf16.msra.mxu0 0
        %1292 = vmatprep.subr.bf16.mxu0 0
        %1293 = vmatpush1.bf16.msra.mxu0 0
        %1294 = vmatprep.mubr.bf16.mxu0 0
        %1295 = vmatmul.mubr.bf16.gmra.mrb[0].mxu0 %v1260
        %v1296 = vpop.f32.mrb[0].mxu0
        %v1297 = vadd.f32 0.0, %v1296
        %v1298 = vpop.f32.mrb[0].mxu0
        %v1299 = vpop.f32.mrb[0].mxu0
        %v1300 = vadd.f32 0.0, %v1299
        %v1301 = vpop.f32.mrb[0].mxu0
        %1302 = vdwg.mxu0
        %1304 = vrot.lane.b32.xlu0 %v1181, 64
        %v1305 = vpop.permute.xlu0 %1304
        %1307 = vrot.lane.b32.xlu0 %v1182, 64
        %v1308 = vpop.permute.xlu0 %1307
        %v1310 = vsel %vm1187, %v1305, 0
        %v1313 = vsel %vm1187, %v1308, 0
        %1315 = vmatprep.subr.bf16.mxu0 0
        %1316 = vmatpush1.bf16.xpose.msra.mxu0 %v1313
        %1317 = vmatprep.subr.bf16.mxu0 0
        %1318 = vmatpush1.bf16.xpose.msra.mxu0 0
        %1319 = vmatprep.subr.bf16.mxu0 0
        %1320 = vmatpush1.bf16.xpose.msra.mxu0 0
        %1321 = vmatprep.subr.bf16.mxu0 0
        %1322 = vmatpush1.bf16.xpose.msra.mxu0 0
        %1323 = vmatprep.subr.bf16.mxu0 0
        %1324 = vmatpush1.bf16.xpose.msra.mxu0 0
        %1325 = vmatprep.subr.bf16.mxu0 0
        %1326 = vmatpush1.bf16.xpose.msra.mxu0 0
        %1327 = vmatprep.subr.bf16.mxu0 0
        %1328 = vmatpush1.bf16.xpose.msra.mxu0 0
        %1329 = vmatprep.subr.bf16.mxu0 0
        %1330 = vmatpush1.bf16.xpose.msra.mxu0 0
        %1331 = vmatprep.subr.bf16.mxu0 0
        %1332 = vmatpush1.bf16.xpose.msra.mxu0 0
        %1333 = vmatprep.subr.bf16.mxu0 0
        %1334 = vmatpush1.bf16.xpose.msra.mxu0 0
        %1335 = vmatprep.subr.bf16.mxu0 0
        %1336 = vmatpush1.bf16.xpose.msra.mxu0 0
        %1337 = vmatprep.subr.bf16.mxu0 0
        %1338 = vmatpush1.bf16.xpose.msra.mxu0 0
        %1339 = vmatprep.subr.bf16.mxu0 0
        %1340 = vmatpush1.bf16.xpose.msra.mxu0 0
        %1341 = vmatprep.subr.bf16.mxu0 0
        %1342 = vmatpush1.bf16.xpose.msra.mxu0 0
        %1343 = vmatprep.subr.bf16.mxu0 0
        %1344 = vmatpush1.bf16.xpose.msra.mxu0 0
        %1345 = vmatprep.subr.bf16.mxu0 0
        %1346 = vmatpush1.bf16.xpose.msra.mxu0 0
        %1347 = vmatprep.mubr.bf16.mxu0 0
        %1348 = vmatmul.mubr.bf16.gmra.mrb[0].mxu0 %v1310
        %v1349 = vpop.f32.mrb[0].mxu0
        %v1350 = vadd.f32 0.0, %v1349
        %v1351 = vpop.f32.mrb[0].mxu0
        %v1352 = vpop.f32.mrb[0].mxu0
        %v1353 = vadd.f32 0.0, %v1352
        %v1354 = vpop.f32.mrb[0].mxu0
        %1355 = vdwg.mxu0
        %v1356 = vsel %vm1235, %v1350, -inf
        %1357 = vmax.xlane.f32.xlu0 %v1356
        %v1358 = vpop.xlane.xlu0 %1357
        %v1359 = vsel %vm1235, %v1353, -inf
        %1360 = vmax.xlane.f32.xlu0 %v1359
        %v1361 = vpop.xlane.xlu0 %1360
        %v1362 = vsub.f32 %v1350, %v1358
        %v1363 = vsub.f32 %v1353, %v1361
        %v1364 = vmul.f32 %v1362, 1.442695
        %v1365 = vpow.pop %v1364
        %v1366 = vmul.f32 %v1363, 1.442695
        %v1367 = vpow.pop %v1366
        %v1368 = vsel %vm1235, %v1365, 0.0
        %1369 = vadd.xlane.f32.xlu0 %v1368
        %v1370 = vpop.xlane.xlu0 %1369
        %v1371 = vsel %vm1235, %v1367, 0.0
        %1372 = vadd.xlane.f32.xlu0 %v1371
        %v1373 = vpop.xlane.xlu0 %1372
        %v1374 = vrcp.pop %v1370
        %v1375 = vrcp.pop %v1373
        %v1376 = vmul.f32 %v1365, %v1374
        %v1377 = vmul.f32 %v1367, %v1375
        %v1378 = vpack.c.bf16 %v1377, %v1376
        %1380 = vrot.lane.b32.xlu0 %v1183, 64
        %v1381 = vpop.permute.xlu0 %1380
        %v1384 = vsel %vm1235, %v1378, 0
        %1386 = vmatprep.subr.bf16.mxu0 0
        %1387 = vmatpush1.bf16.msra.mxu0 %v1381
        %1388 = vmatprep.subr.bf16.mxu0 0
        %1389 = vmatpush1.bf16.msra.mxu0 0
        %1390 = vmatprep.subr.bf16.mxu0 0
        %1391 = vmatpush1.bf16.msra.mxu0 0
        %1392 = vmatprep.subr.bf16.mxu0 0
        %1393 = vmatpush1.bf16.msra.mxu0 0
        %1394 = vmatprep.subr.bf16.mxu0 0
        %1395 = vmatpush1.bf16.msra.mxu0 0
        %1396 = vmatprep.subr.bf16.mxu0 0
        %1397 = vmatpush1.bf16.msra.mxu0 0
        %1398 = vmatprep.subr.bf16.mxu0 0
        %1399 = vmatpush1.bf16.msra.mxu0 0
        %1400 = vmatprep.subr.bf16.mxu0 0
        %1401 = vmatpush1.bf16.msra.mxu0 0
        %1402 = vmatprep.subr.bf16.mxu0 0
        %1403 = vmatpush1.bf16.msra.mxu0 0
        %1404 = vmatprep.subr.bf16.mxu0 0
        %1405 = vmatpush1.bf16.msra.mxu0 0
        %1406 = vmatprep.subr.bf16.mxu0 0
        %1407 = vmatpush1.bf16.msra.mxu0 0
        %1408 = vmatprep.subr.bf16.mxu0 0
        %1409 = vmatpush1.bf16.msra.mxu0 0
        %1410 = vmatprep.subr.bf16.mxu0 0
        %1411 = vmatpush1.bf16.msra.mxu0 0
        %1412 = vmatprep.subr.bf16.mxu0 0
        %1413 = vmatpush1.bf16.msra.mxu0 0
        %1414 = vmatprep.subr.bf16.mxu0 0
        %1415 = vmatpush1.bf16.msra.mxu0 0
        %1416 = vmatprep.subr.bf16.mxu0 0
        %1417 = vmatpush1.bf16.msra.mxu0 0
        %1418 = vmatprep.mubr.bf16.mxu0 0
        %1419 = vmatmul.mubr.bf16.gmra.mrb[0].mxu0 %v1384
        %v1420 = vpop.f32.mrb[0].mxu0
        %v1421 = vadd.f32 0.0, %v1420
        %v1422 = vpop.f32.mrb[0].mxu0
        %v1423 = vpop.f32.mrb[0].mxu0
        %v1424 = vadd.f32 0.0, %v1423
        %v1425 = vpop.f32.mrb[0].mxu0
        %1426 = vdwg.mxu0
        %1429 = vrot.lane.b32.xlu0 %v1421, 64
        %v1430 = vpop.permute.xlu0 %1429
        %1431 = vrot.lane.b32.xlu0 %v1424, 64
        %v1432 = vpop.permute.xlu0 %1431
        %v1435 = vsel %vm1187, %v1297, %v1430
        %v1436 = vsel %vm1187, %v1300, %v1432
        %v1438 = vsel %vm1187, %v1184, 0
        %v1441 = vsel %vm1187, %v1185, 0
        %1443 = vmatprep.subr.bf16.mxu0 0
        %1444 = vmatpush1.bf16.xpose.msra.mxu0 %v1441
        %1445 = vmatprep.subr.bf16.mxu0 0
        %1446 = vmatpush1.bf16.xpose.msra.mxu0 0
        %1447 = vmatprep.subr.bf16.mxu0 0
        %1448 = vmatpush1.bf16.xpose.msra.mxu0 0
        %1449 = vmatprep.subr.bf16.mxu0 0
        %1450 = vmatpush1.bf16.xpose.msra.mxu0 0
        %1451 = vmatprep.subr.bf16.mxu0 0
        %1452 = vmatpush1.bf16.xpose.msra.mxu0 0
        %1453 = vmatprep.subr.bf16.mxu0 0
        %1454 = vmatpush1.bf16.xpose.msra.mxu0 0
        %1455 = vmatprep.subr.bf16.mxu0 0
        %1456 = vmatpush1.bf16.xpose.msra.mxu0 0
        %1457 = vmatprep.subr.bf16.mxu0 0
        %1458 = vmatpush1.bf16.xpose.msra.mxu0 0
        %1459 = vmatprep.subr.bf16.mxu0 0
        %1460 = vmatpush1.bf16.xpose.msra.mxu0 0
        %1461 = vmatprep.subr.bf16.mxu0 0
        %1462 = vmatpush1.bf16.xpose.msra.mxu0 0
        %1463 = vmatprep.subr.bf16.mxu0 0
        %1464 = vmatpush1.bf16.xpose.msra.mxu0 0
        %1465 = vmatprep.subr.bf16.mxu0 0
        %1466 = vmatpush1.bf16.xpose.msra.mxu0 0
        %1467 = vmatprep.subr.bf16.mxu0 0
        %1468 = vmatpush1.bf16.xpose.msra.mxu0 0
        %1469 = vmatprep.subr.bf16.mxu0 0
        %1470 = vmatpush1.bf16.xpose.msra.mxu0 0
        %1471 = vmatprep.subr.bf16.mxu0 0
        %1472 = vmatpush1.bf16.xpose.msra.mxu0 0
        %1473 = vmatprep.subr.bf16.mxu0 0
        %1474 = vmatpush1.bf16.xpose.msra.mxu0 0
        %1475 = vmatprep.mubr.bf16.mxu0 0
        %1476 = vmatmul.mubr.bf16.gmra.mrb[0].mxu0 %v1438
        %v1477 = vpop.f32.mrb[0].mxu0
        %v1478 = vadd.f32 0.0, %v1477
        %v1479 = vpop.f32.mrb[0].mxu0
        %v1480 = vpop.f32.mrb[0].mxu0
        %v1481 = vadd.f32 0.0, %v1480
        %v1482 = vpop.f32.mrb[0].mxu0
        %1483 = vdwg.mxu0
        %v1484 = vsel %vm1235, %v1478, -inf
        %1485 = vmax.xlane.f32.xlu0 %v1484
        %v1486 = vpop.xlane.xlu0 %1485
        %v1487 = vsel %vm1235, %v1481, -inf
        %1488 = vmax.xlane.f32.xlu0 %v1487
        %v1489 = vpop.xlane.xlu0 %1488
        %v1490 = vsub.f32 %v1478, %v1486
        %v1491 = vsub.f32 %v1481, %v1489
        %v1492 = vmul.f32 %v1490, 1.442695
        %v1493 = vpow.pop %v1492
        %v1494 = vmul.f32 %v1491, 1.442695
        %v1495 = vpow.pop %v1494
        %v1496 = vsel %vm1235, %v1493, 0.0
        %1497 = vadd.xlane.f32.xlu0 %v1496
        %v1498 = vpop.xlane.xlu0 %1497
        %v1499 = vsel %vm1235, %v1495, 0.0
        %1500 = vadd.xlane.f32.xlu0 %v1499
        %v1501 = vpop.xlane.xlu0 %1500
        %v1502 = vrcp.pop %v1498
        %v1503 = vrcp.pop %v1501
        %v1504 = vmul.f32 %v1493, %v1502
        %v1505 = vmul.f32 %v1495, %v1503
        %v1506 = vpack.c.bf16 %v1505, %v1504
        %v1508 = vsel %vm1235, %v1506, 0
        %1510 = vmatprep.subr.bf16.mxu0 0
        %1511 = vmatpush1.bf16.msra.mxu0 %v1186
        %1512 = vmatprep.subr.bf16.mxu0 0
        %1513 = vmatpush1.bf16.msra.mxu0 0
        %1514 = vmatprep.subr.bf16.mxu0 0
        %1515 = vmatpush1.bf16.msra.mxu0 0
        %1516 = vmatprep.subr.bf16.mxu0 0
        %1517 = vmatpush1.bf16.msra.mxu0 0
        %1518 = vmatprep.subr.bf16.mxu0 0
        %1519 = vmatpush1.bf16.msra.mxu0 0
        %1520 = vmatprep.subr.bf16.mxu0 0
        %1521 = vmatpush1.bf16.msra.mxu0 0
        %1522 = vmatprep.subr.bf16.mxu0 0
        %1523 = vmatpush1.bf16.msra.mxu0 0
        %1524 = vmatprep.subr.bf16.mxu0 0
        %1525 = vmatpush1.bf16.msra.mxu0 0
        %1526 = vmatprep.subr.bf16.mxu0 0
        %1527 = vmatpush1.bf16.msra.mxu0 0
        %1528 = vmatprep.subr.bf16.mxu0 0
        %1529 = vmatpush1.bf16.msra.mxu0 0
        %1530 = vmatprep.subr.bf16.mxu0 0
        %1531 = vmatpush1.bf16.msra.mxu0 0
        %1532 = vmatprep.subr.bf16.mxu0 0
        %1533 = vmatpush1.bf16.msra.mxu0 0
        %1534 = vmatprep.subr.bf16.mxu0 0
        %1535 = vmatpush1.bf16.msra.mxu0 0
        %1536 = vmatprep.subr.bf16.mxu0 0
        %1537 = vmatpush1.bf16.msra.mxu0 0
        %1538 = vmatprep.subr.bf16.mxu0 0
        %1539 = vmatpush1.bf16.msra.mxu0 0
        %1540 = vmatprep.subr.bf16.mxu0 0
        %1541 = vmatpush1.bf16.msra.mxu0 0
        %1542 = vmatprep.mubr.bf16.mxu0 0
        %1543 = vmatmul.mubr.bf16.gmra.mrb[0].mxu0 %v1508
        %v1544 = vpop.f32.mrb[0].mxu0
        %v1545 = vadd.f32 0.0, %v1544
        %v1546 = vpop.f32.mrb[0].mxu0
        %v1547 = vpop.f32.mrb[0].mxu0
        %v1548 = vadd.f32 0.0, %v1547
        %v1549 = vpop.f32.mrb[0].mxu0
        %1550 = vdwg.mxu0
        %1552 = vrot.lane.b32.xlu0 %v1184, 64
        %v1553 = vpop.permute.xlu0 %1552
        %1555 = vrot.lane.b32.xlu0 %v1185, 64
        %v1556 = vpop.permute.xlu0 %1555
        %v1558 = vsel %vm1187, %v1553, 0
        %v1561 = vsel %vm1187, %v1556, 0
        %1563 = vmatprep.subr.bf16.mxu0 0
        %1564 = vmatpush1.bf16.xpose.msra.mxu0 %v1561
        %1565 = vmatprep.subr.bf16.mxu0 0
        %1566 = vmatpush1.bf16.xpose.msra.mxu0 0
        %1567 = vmatprep.subr.bf16.mxu0 0
        %1568 = vmatpush1.bf16.xpose.msra.mxu0 0
        %1569 = vmatprep.subr.bf16.mxu0 0
        %1570 = vmatpush1.bf16.xpose.msra.mxu0 0
        %1571 = vmatprep.subr.bf16.mxu0 0
        %1572 = vmatpush1.bf16.xpose.msra.mxu0 0
        %1573 = vmatprep.subr.bf16.mxu0 0
        %1574 = vmatpush1.bf16.xpose.msra.mxu0 0
        %1575 = vmatprep.subr.bf16.mxu0 0
        %1576 = vmatpush1.bf16.xpose.msra.mxu0 0
        %1577 = vmatprep.subr.bf16.mxu0 0
        %1578 = vmatpush1.bf16.xpose.msra.mxu0 0
        %1579 = vmatprep.subr.bf16.mxu0 0
        %1580 = vmatpush1.bf16.xpose.msra.mxu0 0
        %1581 = vmatprep.subr.bf16.mxu0 0
        %1582 = vmatpush1.bf16.xpose.msra.mxu0 0
        %1583 = vmatprep.subr.bf16.mxu0 0
        %1584 = vmatpush1.bf16.xpose.msra.mxu0 0
        %1585 = vmatprep.subr.bf16.mxu0 0
        %1586 = vmatpush1.bf16.xpose.msra.mxu0 0
        %1587 = vmatprep.subr.bf16.mxu0 0
        %1588 = vmatpush1.bf16.xpose.msra.mxu0 0
        %1589 = vmatprep.subr.bf16.mxu0 0
        %1590 = vmatpush1.bf16.xpose.msra.mxu0 0
        %1591 = vmatprep.subr.bf16.mxu0 0
        %1592 = vmatpush1.bf16.xpose.msra.mxu0 0
        %1593 = vmatprep.subr.bf16.mxu0 0
        %1594 = vmatpush1.bf16.xpose.msra.mxu0 0
        %1595 = vmatprep.mubr.bf16.mxu0 0
        %1596 = vmatmul.mubr.bf16.gmra.mrb[0].mxu0 %v1558
        %v1597 = vpop.f32.mrb[0].mxu0
        %v1598 = vadd.f32 0.0, %v1597
        %v1599 = vpop.f32.mrb[0].mxu0
        %v1600 = vpop.f32.mrb[0].mxu0
        %v1601 = vadd.f32 0.0, %v1600
        %v1602 = vpop.f32.mrb[0].mxu0
        %1603 = vdwg.mxu0
        %v1604 = vsel %vm1235, %v1598, -inf
        %1605 = vmax.xlane.f32.xlu0 %v1604
        %v1606 = vpop.xlane.xlu0 %1605
        %v1607 = vsel %vm1235, %v1601, -inf
        %1608 = vmax.xlane.f32.xlu0 %v1607
        %v1609 = vpop.xlane.xlu0 %1608
        %v1610 = vsub.f32 %v1598, %v1606
        %v1611 = vsub.f32 %v1601, %v1609
        %v1612 = vmul.f32 %v1610, 1.442695
        %v1613 = vpow.pop %v1612
        %v1614 = vmul.f32 %v1611, 1.442695
        %v1615 = vpow.pop %v1614
        %v1616 = vsel %vm1235, %v1613, 0.0
        %1617 = vadd.xlane.f32.xlu0 %v1616
        %v1618 = vpop.xlane.xlu0 %1617
        %v1619 = vsel %vm1235, %v1615, 0.0
        %1620 = vadd.xlane.f32.xlu0 %v1619
        %v1621 = vpop.xlane.xlu0 %1620
        %v1622 = vrcp.pop %v1618
        %v1623 = vrcp.pop %v1621
        %v1624 = vmul.f32 %v1613, %v1622
        %v1625 = vmul.f32 %v1615, %v1623
        %v1626 = vpack.c.bf16 %v1625, %v1624
        %1628 = vrot.lane.b32.xlu0 %v1186, 64
        %v1629 = vpop.permute.xlu0 %1628
        %v1632 = vsel %vm1235, %v1626, 0
        %1634 = vmatprep.subr.bf16.mxu0 0
        %1635 = vmatpush1.bf16.msra.mxu0 %v1629
        %1636 = vmatprep.subr.bf16.mxu0 0
        %1637 = vmatpush1.bf16.msra.mxu0 0
        %1638 = vmatprep.subr.bf16.mxu0 0
        %1639 = vmatpush1.bf16.msra.mxu0 0
        %1640 = vmatprep.subr.bf16.mxu0 0
        %1641 = vmatpush1.bf16.msra.mxu0 0
        %1642 = vmatprep.subr.bf16.mxu0 0
        %1643 = vmatpush1.bf16.msra.mxu0 0
        %1644 = vmatprep.subr.bf16.mxu0 0
        %1645 = vmatpush1.bf16.msra.mxu0 0
        %1646 = vmatprep.subr.bf16.mxu0 0
        %1647 = vmatpush1.bf16.msra.mxu0 0
        %1648 = vmatprep.subr.bf16.mxu0 0
        %1649 = vmatpush1.bf16.msra.mxu0 0
        %1650 = vmatprep.subr.bf16.mxu0 0
        %1651 = vmatpush1.bf16.msra.mxu0 0
        %1652 = vmatprep.subr.bf16.mxu0 0
        %1653 = vmatpush1.bf16.msra.mxu0 0
        %1654 = vmatprep.subr.bf16.mxu0 0
        %1655 = vmatpush1.bf16.msra.mxu0 0
        %1656 = vmatprep.subr.bf16.mxu0 0
        %1657 = vmatpush1.bf16.msra.mxu0 0
        %1658 = vmatprep.subr.bf16.mxu0 0
        %1659 = vmatpush1.bf16.msra.mxu0 0
        %1660 = vmatprep.subr.bf16.mxu0 0
        %1661 = vmatpush1.bf16.msra.mxu0 0
        %1662 = vmatprep.subr.bf16.mxu0 0
        %1663 = vmatpush1.bf16.msra.mxu0 0
        %1664 = vmatprep.subr.bf16.mxu0 0
        %1665 = vmatpush1.bf16.msra.mxu0 0
        %1666 = vmatprep.mubr.bf16.mxu0 0
        %1667 = vmatmul.mubr.bf16.gmra.mrb[0].mxu0 %v1632
        %v1668 = vpop.f32.mrb[0].mxu0
        %v1669 = vadd.f32 0.0, %v1668
        %v1670 = vpop.f32.mrb[0].mxu0
        %v1671 = vpop.f32.mrb[0].mxu0
        %v1672 = vadd.f32 0.0, %v1671
        %v1673 = vpop.f32.mrb[0].mxu0
        %1674 = vdwg.mxu0
        %1677 = vrot.lane.b32.xlu0 %v1669, 64
        %v1678 = vpop.permute.xlu0 %1677
        %1679 = vrot.lane.b32.xlu0 %v1672, 64
        %v1680 = vpop.permute.xlu0 %1679
        %v1683 = vsel %vm1187, %v1545, %v1678
        %v1684 = vsel %vm1187, %v1548, %v1680
        %v1685 = vpack.c.bf16 %v1436, %v1435
        %v1686 = vpack.c.bf16 %v1684, %v1683
        %v1687 = vld [vmem:[%s684] sm:$0xf]
        %v1688 = vld [vmem:[%s684 + $0x4] sm:$0xf]
        %v1689 = vld [vmem:[%s684 + $0x8] sm:$0xf]
        %v1690 = vld [vmem:[%s684 + $0xc] sm:$0xf]
        %v1691 = vld [vmem:[%s684 + $0x10] sm:$0xf]
        %v1692 = vld [vmem:[%s684 + $0x14] sm:$0xf]
        %v1693 = vld [vmem:[%s684 + $0x18] sm:$0xf]
        %v1694 = vld [vmem:[%s684 + $0x1c] sm:$0xf]
        %v1695 = vld [vmem:[%s684 + $0x20] sm:$0xf]
        %v1696 = vld [vmem:[%s684 + $0x24] sm:$0xf]
        %v1697 = vld [vmem:[%s684 + $0x28] sm:$0xf]
        %v1698 = vld [vmem:[%s684 + $0x2c] sm:$0xf]
        %v1699 = vld [vmem:[%s684 + $0x30] sm:$0xf]
        %v1700 = vld [vmem:[%s684 + $0x34] sm:$0xf]
        %v1701 = vld [vmem:[%s684 + $0x38] sm:$0xf]
        %v1702 = vld [vmem:[%s684 + $0x3c] sm:$0xf]
        %v1719 = vunpack.c.l.b16 %v1687
        %v1720 = vunpack.c.l.b16 %v1688
        %v1721 = vunpack.c.l.b16 %v1689
        %v1722 = vunpack.c.l.b16 %v1690
        %v1723 = vunpack.c.l.b16 %v1691
        %v1724 = vunpack.c.l.b16 %v1692
        %v1725 = vunpack.c.l.b16 %v1693
        %v1726 = vunpack.c.l.b16 %v1694
        %v1727 = vunpack.c.l.b16 %v1695
        %v1728 = vunpack.c.l.b16 %v1696
        %v1729 = vunpack.c.l.b16 %v1697
        %v1730 = vunpack.c.l.b16 %v1698
        %v1731 = vunpack.c.l.b16 %v1699
        %v1732 = vunpack.c.l.b16 %v1700
        %v1733 = vunpack.c.l.b16 %v1701
        %v1734 = vunpack.c.l.b16 %v1702
        %v1735 = vpack.c.b16 %v1720, %v1719
        %v1736 = vpack.c.b16 %v1722, %v1721
        %v1737 = vpack.c.b16 %v1724, %v1723
        %v1738 = vpack.c.b16 %v1726, %v1725
        %v1739 = vpack.c.b16 %v1728, %v1727
        %v1740 = vpack.c.b16 %v1730, %v1729
        %v1741 = vpack.c.b16 %v1732, %v1731
        %v1742 = vpack.c.b16 %v1734, %v1733
        %1751 = vmatprep.subr.bf16.mxu0 0
        %1752 = vmatpush1.bf16.msra.mxu0 %v1735
        %1753 = vmatprep.subr.bf16.mxu0 0
        %1754 = vmatpush1.bf16.msra.mxu0 %v1736
        %1755 = vmatprep.subr.bf16.mxu0 0
        %1756 = vmatpush1.bf16.msra.mxu0 %v1737
        %1757 = vmatprep.subr.bf16.mxu0 0
        %1758 = vmatpush1.bf16.msra.mxu0 %v1738
        %1759 = vmatprep.subr.bf16.mxu0 0
        %1760 = vmatpush1.bf16.msra.mxu0 %v1739
        %1761 = vmatprep.subr.bf16.mxu0 0
        %1762 = vmatpush1.bf16.msra.mxu0 %v1740
        %1763 = vmatprep.subr.bf16.mxu0 0
        %1764 = vmatpush1.bf16.msra.mxu0 %v1741
        %1765 = vmatprep.subr.bf16.mxu0 0
        %1766 = vmatpush1.bf16.msra.mxu0 %v1742
        %1767 = vmatprep.subr.bf16.mxu0 0
        %1768 = vmatpush1.bf16.msra.mxu0 0
        %1769 = vmatprep.subr.bf16.mxu0 0
        %1770 = vmatpush1.bf16.msra.mxu0 0
        %1771 = vmatprep.subr.bf16.mxu0 0
        %1772 = vmatpush1.bf16.msra.mxu0 0
        %1773 = vmatprep.subr.bf16.mxu0 0
        %1774 = vmatpush1.bf16.msra.mxu0 0
        %1775 = vmatprep.subr.bf16.mxu0 0
        %1776 = vmatpush1.bf16.msra.mxu0 0
        %1777 = vmatprep.subr.bf16.mxu0 0
        %1778 = vmatpush1.bf16.msra.mxu0 0
        %1779 = vmatprep.subr.bf16.mxu0 0
        %1780 = vmatpush1.bf16.msra.mxu0 0
        %1781 = vmatprep.subr.bf16.mxu0 0
        %1782 = vmatpush1.bf16.msra.mxu0 0
        %1783 = vmatprep.mubr.bf16.mxu0 0
        %1784 = vmatmul.mubr.bf16.gmra.mrb[0].mxu0 %v1685
        %v1785 = vpop.f32.mrb[0].mxu0
        %v1786 = vadd.f32 0.0, %v1785
        %v1787 = vpop.f32.mrb[0].mxu0
        %v1788 = vpop.f32.mrb[0].mxu0
        %v1789 = vadd.f32 0.0, %v1788
        %v1790 = vpop.f32.mrb[0].mxu0
        %1791 = vmatprep.mubr.bf16.mxu0 0
        %1792 = vmatmul.mubr.bf16.gmra.mrb[0].mxu0 %v1686
        %v1793 = vpop.f32.mrb[0].mxu0
        %v1794 = vadd.f32 0.0, %v1793
        %v1795 = vpop.f32.mrb[0].mxu0
        %v1796 = vpop.f32.mrb[0].mxu0
        %v1797 = vadd.f32 0.0, %v1796
        %v1798 = vpop.f32.mrb[0].mxu0
        %1799 = vdwg.mxu0
        %v1800 = vadd.f32 %v846, %v1786
        %v1801 = vadd.f32 %v847, %v1789
        %v1802 = vadd.f32 %v848, %v1794
        %v1803 = vadd.f32 %v849, %v1797
        %v1804 = vld [vmem:[%s687] sm:$0x1]
        %v1806 = vlaneseq
        %v1807 = vshrl.u32 %v1806, 7
        %v1808 = vsub.s32 0, %v1807
        %v1809 = vrot.slane %v1804, %v1808
        %v1811 = vadd.f32 %v1800, %v1809
        %v1812 = vadd.f32 %v1801, %v1809
        %v1813 = vadd.f32 %v1802, %v1809
        %v1814 = vadd.f32 %v1803, %v1809
        %v1815 = vld [vmem:[%s690] sm:$0x1]
        %v1816 = vld [vmem:[%s693] sm:$0x1]
        %1817 = vadd.xlane.f32.xlu0 %v1811
        %v1818 = vpop.xlane.xlu0 %1817
        %1819 = vadd.xlane.f32.xlu0 %v1812
        %v1820 = vpop.xlane.xlu0 %1819
        %1821 = vadd.xlane.f32.xlu0 %v1813
        %v1822 = vpop.xlane.xlu0 %1821
        %1823 = vadd.xlane.f32.xlu0 %v1814
        %v1824 = vpop.xlane.xlu0 %1823
        %v1825 = vmul.f32 %v1818, %v860
        %v1826 = vmul.f32 %v1820, %v860
        %v1827 = vmul.f32 %v1822, %v860
        %v1828 = vmul.f32 %v1824, %v860
        %v1829 = vsub.f32 %v1811, %v1825
        %v1830 = vsub.f32 %v1812, %v1826
        %v1831 = vsub.f32 %v1813, %v1827
        %v1832 = vsub.f32 %v1814, %v1828
        %v1833 = vmul.f32 %v1829, %v1829
        %v1834 = vmul.f32 %v1830, %v1830
        %v1835 = vmul.f32 %v1831, %v1831
        %v1836 = vmul.f32 %v1832, %v1832
        %1837 = vadd.xlane.f32.xlu0 %v1833
        %v1838 = vpop.xlane.xlu0 %1837
        %1839 = vadd.xlane.f32.xlu0 %v1834
        %v1840 = vpop.xlane.xlu0 %1839
        %1841 = vadd.xlane.f32.xlu0 %v1835
        %v1842 = vpop.xlane.xlu0 %1841
        %1843 = vadd.xlane.f32.xlu0 %v1836
        %v1844 = vpop.xlane.xlu0 %1843
        %v1845 = vmul.f32 %v1838, %v860
        %v1846 = vmul.f32 %v1840, %v860
        %v1847 = vmul.f32 %v1842, %v860
        %v1848 = vmul.f32 %v1844, %v860
        %v1849 = vadd.f32 %v1845, 1e-05
        %v1850 = vadd.f32 %v1846, 1e-05
        %v1851 = vadd.f32 %v1847, 1e-05
        %v1852 = vadd.f32 %v1848, 1e-05
        %v1853 = vrsqrt.pop %v1849
        %v1854 = vrsqrt.pop %v1850
        %v1855 = vrsqrt.pop %v1851
        %v1856 = vrsqrt.pop %v1852
        %v1857 = vmul.f32 %v1829, %v1853
        %v1858 = vmul.f32 %v1830, %v1854
        %v1859 = vmul.f32 %v1831, %v1855
        %v1860 = vmul.f32 %v1832, %v1856
        %v1862 = vlaneseq
        %v1863 = vshrl.u32 %v1862, 7
        %v1864 = vsub.s32 0, %v1863
        %v1865 = vrot.slane %v1815, %v1864
        %v1867 = vmul.f32 %v1857, %v1865
        %v1868 = vmul.f32 %v1858, %v1865
        %v1869 = vmul.f32 %v1859, %v1865
        %v1870 = vmul.f32 %v1860, %v1865
        %v1872 = vlaneseq
        %v1873 = vshrl.u32 %v1872, 7
        %v1874 = vsub.s32 0, %v1873
        %v1875 = vrot.slane %v1816, %v1874
        %v1877 = vadd.f32 %v1867, %v1875
        %v1878 = vadd.f32 %v1868, %v1875
        %v1879 = vadd.f32 %v1869, %v1875
        %v1880 = vadd.f32 %v1870, %v1875
        %v1881 = vpack.c.bf16 %v1878, %v1877
        %v1882 = vpack.c.bf16 %v1880, %v1879
        %v1883 = vld [vmem:[%s698] sm:$0xff]
        %v1884 = vld [vmem:[%s698 + $0x8] sm:$0xff]
        %v1885 = vld [vmem:[%s698 + $0x10] sm:$0xff]
        %v1886 = vld [vmem:[%s698 + $0x18] sm:$0xff]
        %v1887 = vld [vmem:[%s698 + $0x20] sm:$0xff]
        %v1888 = vld [vmem:[%s698 + $0x28] sm:$0xff]
        %v1889 = vld [vmem:[%s698 + $0x30] sm:$0xff]
        %v1890 = vld [vmem:[%s698 + $0x38] sm:$0xff]
        %v1891 = vld [vmem:[%s698 + $0x40] sm:$0xff]
        %v1892 = vld [vmem:[%s698 + $0x48] sm:$0xff]
        %v1893 = vld [vmem:[%s698 + $0x50] sm:$0xff]
        %v1894 = vld [vmem:[%s698 + $0x58] sm:$0xff]
        %v1895 = vld [vmem:[%s698 + $0x60] sm:$0xff]
        %v1896 = vld [vmem:[%s698 + $0x68] sm:$0xff]
        %v1897 = vld [vmem:[%s698 + $0x70] sm:$0xff]
        %v1898 = vld [vmem:[%s698 + $0x78] sm:$0xff]
        %v1899 = vld [vmem:[%s702] sm:$0x3]
        %v1901 = vlaneseq
        %v1902 = vshrl.u32 %v1901, 7
        %v1903 = vsub.s32 0, %v1902
        %v1904 = vrot.slane %v1899, %v1903
        %v1905 = vlaneseq
        %v1906 = vshrl.u32 %v1905, 7
        %v1907 = vsub.s32 1, %v1906
        %v1908 = vrot.slane %v1899, %v1907
        %v1927 = vunpack.c.l.b16 %v1883
        %v1928 = vunpack.c.h.b16 %v1883
        %v1929 = vunpack.c.l.b16 %v1884
        %v1930 = vunpack.c.h.b16 %v1884
        %v1931 = vunpack.c.l.b16 %v1885
        %v1932 = vunpack.c.h.b16 %v1885
        %v1933 = vunpack.c.l.b16 %v1886
        %v1934 = vunpack.c.h.b16 %v1886
        %v1935 = vunpack.c.l.b16 %v1887
        %v1936 = vunpack.c.h.b16 %v1887
        %v1937 = vunpack.c.l.b16 %v1888
        %v1938 = vunpack.c.h.b16 %v1888
        %v1939 = vunpack.c.l.b16 %v1889
        %v1940 = vunpack.c.h.b16 %v1889
        %v1941 = vunpack.c.l.b16 %v1890
        %v1942 = vunpack.c.h.b16 %v1890
        %v1943 = vunpack.c.l.b16 %v1891
        %v1944 = vunpack.c.h.b16 %v1891
        %v1945 = vunpack.c.l.b16 %v1892
        %v1946 = vunpack.c.h.b16 %v1892
        %v1947 = vunpack.c.l.b16 %v1893
        %v1948 = vunpack.c.h.b16 %v1893
        %v1949 = vunpack.c.l.b16 %v1894
        %v1950 = vunpack.c.h.b16 %v1894
        %v1951 = vunpack.c.l.b16 %v1895
        %v1952 = vunpack.c.h.b16 %v1895
        %v1953 = vunpack.c.l.b16 %v1896
        %v1954 = vunpack.c.h.b16 %v1896
        %v1955 = vunpack.c.l.b16 %v1897
        %v1956 = vunpack.c.h.b16 %v1897
        %v1957 = vunpack.c.l.b16 %v1898
        %v1958 = vunpack.c.h.b16 %v1898
        %v1959 = vpack.c.b16 %v1929, %v1927
        %v1960 = vpack.c.b16 %v1930, %v1928
        %v1961 = vpack.c.b16 %v1933, %v1931
        %v1962 = vpack.c.b16 %v1934, %v1932
        %v1963 = vpack.c.b16 %v1937, %v1935
        %v1964 = vpack.c.b16 %v1938, %v1936
        %v1965 = vpack.c.b16 %v1941, %v1939
        %v1966 = vpack.c.b16 %v1942, %v1940
        %v1967 = vpack.c.b16 %v1945, %v1943
        %v1968 = vpack.c.b16 %v1946, %v1944
        %v1969 = vpack.c.b16 %v1949, %v1947
        %v1970 = vpack.c.b16 %v1950, %v1948
        %v1971 = vpack.c.b16 %v1953, %v1951
        %v1972 = vpack.c.b16 %v1954, %v1952
        %v1973 = vpack.c.b16 %v1957, %v1955
        %v1974 = vpack.c.b16 %v1958, %v1956
        %1991 = vmatprep.subr.bf16.mxu0 %v1960
        %1992 = vmatpush1.bf16.msra.mxu0 %v1959
        %1993 = vmatprep.subr.bf16.mxu0 %v1962
        %1994 = vmatpush1.bf16.msra.mxu0 %v1961
        %1995 = vmatprep.subr.bf16.mxu0 %v1964
        %1996 = vmatpush1.bf16.msra.mxu0 %v1963
        %1997 = vmatprep.subr.bf16.mxu0 %v1966
        %1998 = vmatpush1.bf16.msra.mxu0 %v1965
        %1999 = vmatprep.subr.bf16.mxu0 %v1968
        %2000 = vmatpush1.bf16.msra.mxu0 %v1967
        %2001 = vmatprep.subr.bf16.mxu0 %v1970
        %2002 = vmatpush1.bf16.msra.mxu0 %v1969
        %2003 = vmatprep.subr.bf16.mxu0 %v1972
        %2004 = vmatpush1.bf16.msra.mxu0 %v1971
        %2005 = vmatprep.subr.bf16.mxu0 %v1974
        %2006 = vmatpush1.bf16.msra.mxu0 %v1973
        %2007 = vmatprep.subr.bf16.mxu0 0
        %2008 = vmatpush1.bf16.msra.mxu0 0
        %2009 = vmatprep.subr.bf16.mxu0 0
        %2010 = vmatpush1.bf16.msra.mxu0 0
        %2011 = vmatprep.subr.bf16.mxu0 0
        %2012 = vmatpush1.bf16.msra.mxu0 0
        %2013 = vmatprep.subr.bf16.mxu0 0
        %2014 = vmatpush1.bf16.msra.mxu0 0
        %2015 = vmatprep.subr.bf16.mxu0 0
        %2016 = vmatpush1.bf16.msra.mxu0 0
        %2017 = vmatprep.subr.bf16.mxu0 0
        %2018 = vmatpush1.bf16.msra.mxu0 0
        %2019 = vmatprep.subr.bf16.mxu0 0
        %2020 = vmatpush1.bf16.msra.mxu0 0
        %2021 = vmatprep.subr.bf16.mxu0 0
        %2022 = vmatpush1.bf16.msra.mxu0 0
        %2023 = vmatprep.mubr.bf16.mxu0 0
        %2024 = vmatmul.mubr.bf16.gmra.mrb[0].mxu0 %v1881
        %v2025 = vpop.f32.mrb[0].mxu0
        %v2026 = vadd.f32 %v1904, %v2025
        %v2027 = vpop.f32.mrb[0].mxu0
        %v2028 = vadd.f32 %v1908, %v2027
        %v2029 = vpop.f32.mrb[0].mxu0
        %v2030 = vadd.f32 %v1904, %v2029
        %v2031 = vpop.f32.mrb[0].mxu0
        %v2032 = vadd.f32 %v1908, %v2031
        %2033 = vmatprep.mubr.bf16.mxu0 0
        %2034 = vmatmul.mubr.bf16.gmra.mrb[0].mxu0 %v1882
        %v2035 = vpop.f32.mrb[0].mxu0
        %v2036 = vadd.f32 %v1904, %v2035
        %v2037 = vpop.f32.mrb[0].mxu0
        %v2038 = vadd.f32 %v1908, %v2037
        %v2039 = vpop.f32.mrb[0].mxu0
        %v2040 = vadd.f32 %v1904, %v2039
        %v2041 = vpop.f32.mrb[0].mxu0
        %v2042 = vadd.f32 %v1908, %v2041
        %2043 = vdwg.mxu0
        %v2044 = vtanh.pop %v2026
        %v2045 = vtanh.pop %v2028
        %v2046 = vtanh.pop %v2030
        %v2047 = vtanh.pop %v2032
        %v2048 = vtanh.pop %v2036
        %v2049 = vtanh.pop %v2038
        %v2050 = vtanh.pop %v2040
        %v2051 = vtanh.pop %v2042
        %v2052 = vpack.c.bf16 %v2046, %v2044
        %v2053 = vpack.c.bf16 %v2047, %v2045
        %v2054 = vpack.c.bf16 %v2050, %v2048
        %v2055 = vpack.c.bf16 %v2051, %v2049
        %v2056 = vld [vmem:[%s707] sm:$0xf]
        %v2057 = vld [vmem:[%s707 + $0x4] sm:$0xf]
        %v2058 = vld [vmem:[%s707 + $0x8] sm:$0xf]
        %v2059 = vld [vmem:[%s707 + $0xc] sm:$0xf]
        %v2060 = vld [vmem:[%s707 + $0x10] sm:$0xf]
        %v2061 = vld [vmem:[%s707 + $0x14] sm:$0xf]
        %v2062 = vld [vmem:[%s707 + $0x18] sm:$0xf]
        %v2063 = vld [vmem:[%s707 + $0x1c] sm:$0xf]
        %v2064 = vld [vmem:[%s707 + $0x20] sm:$0xf]
        %v2065 = vld [vmem:[%s707 + $0x24] sm:$0xf]
        %v2066 = vld [vmem:[%s707 + $0x28] sm:$0xf]
        %v2067 = vld [vmem:[%s707 + $0x2c] sm:$0xf]
        %v2068 = vld [vmem:[%s707 + $0x30] sm:$0xf]
        %v2069 = vld [vmem:[%s707 + $0x34] sm:$0xf]
        %v2070 = vld [vmem:[%s707 + $0x38] sm:$0xf]
        %v2071 = vld [vmem:[%s707 + $0x3c] sm:$0xf]
        %v2072 = vld [vmem:[%s707 + $0x40] sm:$0xf]
        %v2073 = vld [vmem:[%s707 + $0x44] sm:$0xf]
        %v2074 = vld [vmem:[%s707 + $0x48] sm:$0xf]
        %v2075 = vld [vmem:[%s707 + $0x4c] sm:$0xf]
        %v2076 = vld [vmem:[%s707 + $0x50] sm:$0xf]
        %v2077 = vld [vmem:[%s707 + $0x54] sm:$0xf]
        %v2078 = vld [vmem:[%s707 + $0x58] sm:$0xf]
        %v2079 = vld [vmem:[%s707 + $0x5c] sm:$0xf]
        %v2080 = vld [vmem:[%s707 + $0x60] sm:$0xf]
        %v2081 = vld [vmem:[%s707 + $0x64] sm:$0xf]
        %v2082 = vld [vmem:[%s707 + $0x68] sm:$0xf]
        %v2083 = vld [vmem:[%s707 + $0x6c] sm:$0xf]
        %v2084 = vld [vmem:[%s707 + $0x70] sm:$0xf]
        %v2085 = vld [vmem:[%s707 + $0x74] sm:$0xf]
        %v2086 = vld [vmem:[%s707 + $0x78] sm:$0xf]
        %v2087 = vld [vmem:[%s707 + $0x7c] sm:$0xf]
        %v2088 = vld [vmem:[%s710] sm:$0x1]
        %v2090 = vlaneseq
        %v2091 = vshrl.u32 %v2090, 7
        %v2092 = vsub.s32 0, %v2091
        %v2093 = vrot.slane %v2088, %v2092
        %v2127 = vunpack.c.l.b16 %v2056
        %v2128 = vunpack.c.l.b16 %v2057
        %v2129 = vunpack.c.l.b16 %v2058
        %v2130 = vunpack.c.l.b16 %v2059
        %v2131 = vunpack.c.l.b16 %v2060
        %v2132 = vunpack.c.l.b16 %v2061
        %v2133 = vunpack.c.l.b16 %v2062
        %v2134 = vunpack.c.l.b16 %v2063
        %v2135 = vunpack.c.l.b16 %v2064
        %v2136 = vunpack.c.l.b16 %v2065
        %v2137 = vunpack.c.l.b16 %v2066
        %v2138 = vunpack.c.l.b16 %v2067
        %v2139 = vunpack.c.l.b16 %v2068
        %v2140 = vunpack.c.l.b16 %v2069
        %v2141 = vunpack.c.l.b16 %v2070
        %v2142 = vunpack.c.l.b16 %v2071
        %v2143 = vunpack.c.l.b16 %v2072
        %v2144 = vunpack.c.l.b16 %v2073
        %v2145 = vunpack.c.l.b16 %v2074
        %v2146 = vunpack.c.l.b16 %v2075
        %v2147 = vunpack.c.l.b16 %v2076
        %v2148 = vunpack.c.l.b16 %v2077
        %v2149 = vunpack.c.l.b16 %v2078
        %v2150 = vunpack.c.l.b16 %v2079
        %v2151 = vunpack.c.l.b16 %v2080
        %v2152 = vunpack.c.l.b16 %v2081
        %v2153 = vunpack.c.l.b16 %v2082
        %v2154 = vunpack.c.l.b16 %v2083
        %v2155 = vunpack.c.l.b16 %v2084
        %v2156 = vunpack.c.l.b16 %v2085
        %v2157 = vunpack.c.l.b16 %v2086
        %v2158 = vunpack.c.l.b16 %v2087
        %v2159 = vpack.c.b16 %v2128, %v2127
        %v2160 = vpack.c.b16 %v2130, %v2129
        %v2161 = vpack.c.b16 %v2132, %v2131
        %v2162 = vpack.c.b16 %v2134, %v2133
        %v2163 = vpack.c.b16 %v2136, %v2135
        %v2164 = vpack.c.b16 %v2138, %v2137
        %v2165 = vpack.c.b16 %v2140, %v2139
        %v2166 = vpack.c.b16 %v2142, %v2141
        %v2167 = vpack.c.b16 %v2144, %v2143
        %v2168 = vpack.c.b16 %v2146, %v2145
        %v2169 = vpack.c.b16 %v2148, %v2147
        %v2170 = vpack.c.b16 %v2150, %v2149
        %v2171 = vpack.c.b16 %v2152, %v2151
        %v2172 = vpack.c.b16 %v2154, %v2153
        %v2173 = vpack.c.b16 %v2156, %v2155
        %v2174 = vpack.c.b16 %v2158, %v2157
        %2191 = vmatprep.subr.bf16.mxu0 0
        %2192 = vmatpush1.bf16.msra.mxu0 %v2159
        %2193 = vmatprep.subr.bf16.mxu0 0
        %2194 = vmatpush1.bf16.msra.mxu0 %v2160
        %2195 = vmatprep.subr.bf16.mxu0 0
        %2196 = vmatpush1.bf16.msra.mxu0 %v2161
        %2197 = vmatprep.subr.bf16.mxu0 0
        %2198 = vmatpush1.bf16.msra.mxu0 %v2162
        %2199 = vmatprep.subr.bf16.mxu0 0
        %2200 = vmatpush1.bf16.msra.mxu0 %v2163
        %2201 = vmatprep.subr.bf16.mxu0 0
        %2202 = vmatpush1.bf16.msra.mxu0 %v2164
        %2203 = vmatprep.subr.bf16.mxu0 0
        %2204 = vmatpush1.bf16.msra.mxu0 %v2165
        %2205 = vmatprep.subr.bf16.mxu0 0
        %2206 = vmatpush1.bf16.msra.mxu0 %v2166
        %2207 = vmatprep.subr.bf16.mxu0 0
        %2208 = vmatpush1.bf16.msra.mxu0 %v2167
        %2209 = vmatprep.subr.bf16.mxu0 0
        %2210 = vmatpush1.bf16.msra.mxu0 %v2168
        %2211 = vmatprep.subr.bf16.mxu0 0
        %2212 = vmatpush1.bf16.msra.mxu0 %v2169
        %2213 = vmatprep.subr.bf16.mxu0 0
        %2214 = vmatpush1.bf16.msra.mxu0 %v2170
        %2215 = vmatprep.subr.bf16.mxu0 0
        %2216 = vmatpush1.bf16.msra.mxu0 %v2171
        %2217 = vmatprep.subr.bf16.mxu0 0
        %2218 = vmatpush1.bf16.msra.mxu0 %v2172
        %2219 = vmatprep.subr.bf16.mxu0 0
        %2220 = vmatpush1.bf16.msra.mxu0 %v2173
        %2221 = vmatprep.subr.bf16.mxu0 0
        %2222 = vmatpush1.bf16.msra.mxu0 %v2174
        %2223 = vmatprep.mubr.bf16.mxu0 %v2053
        %2224 = vmatmul.mubr.bf16.gmra.mrb[0].mxu0 %v2052
        %v2225 = vpop.f32.mrb[0].mxu0
        %v2226 = vadd.f32 %v2093, %v2225
        %v2227 = vpop.f32.mrb[0].mxu0
        %v2228 = vpop.f32.mrb[0].mxu0
        %v2229 = vadd.f32 %v2093, %v2228
        %v2230 = vpop.f32.mrb[0].mxu0
        %2231 = vmatprep.mubr.bf16.mxu0 %v2055
        %2232 = vmatmul.mubr.bf16.gmra.mrb[0].mxu0 %v2054
        %v2233 = vpop.f32.mrb[0].mxu0
        %v2234 = vadd.f32 %v2093, %v2233
        %v2235 = vpop.f32.mrb[0].mxu0
        %v2236 = vpop.f32.mrb[0].mxu0
        %v2237 = vadd.f32 %v2093, %v2236
        %v2238 = vpop.f32.mrb[0].mxu0
        %2239 = vdwg.mxu0
        %v2240 = vadd.f32 %v1811, %v2226
        %v2241 = vadd.f32 %v1812, %v2229
        %v2242 = vadd.f32 %v1813, %v2234
        %v2243 = vadd.f32 %v1814, %v2237
        %2244 = vst [vmem:[#allocation2] sm:$0xff] %v2240
        %2245 = vst [vmem:[#allocation2 + $0x8] sm:$0xff] %v2241
        %2246 = vst [vmem:[#allocation2 + $0x10] sm:$0xff] %v2242
        %2247 = vst [vmem:[#allocation2 + $0x18] sm:$0xff] %v2243
        %p2248 = scmp.eq.s32.totalorder %s33, 1
        // Predicated region
        $region89: #{encoder_vit_forward.1} parent=83 // pred_check
          %p2249 = pneg %p2248
        $region90: #{encoder_vit_forward.1} parent=83 // pred_check_branch
          %2251 = sbr.rel (%p2249) target = $region92
        $region91: #{encoder_vit_forward.1} parent=83 // pred_region
          %v2252 = vld [vmem:[%s14] sm:$0x1]
          %v2253 = vld [vmem:[%s15] sm:$0x1]
          %2254 = vadd.xlane.f32.xlu0 %v2240
          %v2255 = vpop.xlane.xlu0 %2254
          %2256 = vadd.xlane.f32.xlu0 %v2241
          %v2257 = vpop.xlane.xlu0 %2256
          %2258 = vadd.xlane.f32.xlu0 %v2242
          %v2259 = vpop.xlane.xlu0 %2258
          %2260 = vadd.xlane.f32.xlu0 %v2243
          %v2261 = vpop.xlane.xlu0 %2260
          %v2262 = vmul.f32 %v2255, %v860
          %v2263 = vmul.f32 %v2257, %v860
          %v2264 = vmul.f32 %v2259, %v860
          %v2265 = vmul.f32 %v2261, %v860
          %v2266 = vsub.f32 %v2240, %v2262
          %v2267 = vsub.f32 %v2241, %v2263
          %v2268 = vsub.f32 %v2242, %v2264
          %v2269 = vsub.f32 %v2243, %v2265
          %v2270 = vmul.f32 %v2266, %v2266
          %v2271 = vmul.f32 %v2267, %v2267
          %v2272 = vmul.f32 %v2268, %v2268
          %v2273 = vmul.f32 %v2269, %v2269
          %2274 = vadd.xlane.f32.xlu0 %v2270
          %v2275 = vpop.xlane.xlu0 %2274
          %2276 = vadd.xlane.f32.xlu0 %v2271
          %v2277 = vpop.xlane.xlu0 %2276
          %2278 = vadd.xlane.f32.xlu0 %v2272
          %v2279 = vpop.xlane.xlu0 %2278
          %2280 = vadd.xlane.f32.xlu0 %v2273
          %v2281 = vpop.xlane.xlu0 %2280
          %v2282 = vmul.f32 %v2275, %v860
          %v2283 = vmul.f32 %v2277, %v860
          %v2284 = vmul.f32 %v2279, %v860
          %v2285 = vmul.f32 %v2281, %v860
          %v2286 = vadd.f32 %v2282, 1e-05
          %v2287 = vadd.f32 %v2283, 1e-05
          %v2288 = vadd.f32 %v2284, 1e-05
          %v2289 = vadd.f32 %v2285, 1e-05
          %v2290 = vrsqrt.pop %v2286
          %v2291 = vrsqrt.pop %v2287
          %v2292 = vrsqrt.pop %v2288
          %v2293 = vrsqrt.pop %v2289
          %v2294 = vmul.f32 %v2266, %v2290
          %v2295 = vmul.f32 %v2267, %v2291
          %v2296 = vmul.f32 %v2268, %v2292
          %v2297 = vmul.f32 %v2269, %v2293
          %v2299 = vlaneseq
          %v2300 = vshrl.u32 %v2299, 7
          %v2301 = vsub.s32 0, %v2300
          %v2302 = vrot.slane %v2252, %v2301
          %v2304 = vmul.f32 %v2294, %v2302
          %v2305 = vmul.f32 %v2295, %v2302
          %v2306 = vmul.f32 %v2296, %v2302
          %v2307 = vmul.f32 %v2297, %v2302
          %v2309 = vlaneseq
          %v2310 = vshrl.u32 %v2309, 7
          %v2311 = vsub.s32 0, %v2310
          %v2312 = vrot.slane %v2253, %v2311
          %v2314 = vadd.f32 %v2304, %v2312
          %v2315 = vadd.f32 %v2305, %v2312
          %v2316 = vadd.f32 %v2306, %v2312
          %v2317 = vadd.f32 %v2307, %v2312
          %2318 = vst [vmem:[#allocation3] sm:$0xff] %v2314
          %2319 = vst [vmem:[#allocation3 + $0x8] sm:$0xff] %v2315
          %2320 = vst [vmem:[#allocation3 + $0x10] sm:$0xff] %v2316
          %2321 = vst [vmem:[#allocation3 + $0x18] sm:$0xff] %v2317
        $region92: #{encoder_vit_forward.1} parent=83 // pred_fallthru
          _
        // Predicated region
        $region93: #{encoder_vit_forward.1} parent=83 // pred_check
          %p2322 = pneg %p454
        $region94: #{encoder_vit_forward.1} parent=83 // pred_check_branch
          %2324 = sbr.rel (%p2322) target = $region96
        $region95: #{encoder_vit_forward.1} parent=83 // pred_region
          %s2325 = smul.u32 2, %s32
          %s2327 = ssub.s32 512, 512
          %2328 = vsyncadd [#allocation4], %s2327
          %s2329 = smul.addr %s2325, 2
          %s2330 = smul.addr %s2329, 128
          %s2331 = scalar_lea.hbm %s16, %s2330
          %s2332 = sshll.u32 [#allocation3], 4
          %s2333 = int_to_ptr.vmem [resolvable:$true] %s2332
          %2338 = dma.vmem_to_hbm [thread:$0]  %s2333, 512, %s2331, [#allocation4], 128, 128, 8
        $region96: #{encoder_vit_forward.1} parent=83 // pred_fallthru
          _
        // Predicated region
        $region97: #{encoder_vit_forward.1} parent=83 // pred_check
          %p2339 = pneg %p454
        $region98: #{encoder_vit_forward.1} parent=83 // pred_check_branch
          %2341 = sbr.rel (%p2339) target = $region100
        $region99: #{encoder_vit_forward.1} parent=83 // pred_region
          %2342 = dma.done [#allocation4], 512
        $region100: #{encoder_vit_forward.1} parent=83 // pred_fallthru
          _
      $region84: #{encoder_vit_forward.1} parent=5 // pred_fallthru
        _
      %p2343 = scmp.le.s32.totalorder 2, %s23
      // Predicated region
      $region101: #{encoder_vit_forward.1} parent=5 // pred_check
        %p2344 = pneg %p2343
      $region102: #{encoder_vit_forward.1} parent=5 // pred_check_branch
        %2346 = sbr.rel (%p2344) target = $region104
      $region103: #{encoder_vit_forward.1} parent=5 // pred_region
        %s2347 = ssub.s32 %s23, 2
      $region104: #{encoder_vit_forward.1} parent=5 // pred_fallthru
        _
    $region6: #{encoder_vit_forward.1} parent=1 // loop_footer
      %s27 = sadd.s32 1, %s23
    $region7: #{encoder_vit_forward.1} parent=1 // loop_footer_branch
      %22 = sbr.rel target = $region3
    $region8: #{encoder_vit_forward.1} parent=1 // loop_exit
      _
    %2348 = vsyncpa [#allocation4], 1
    %s2349 = scalar_lea.sflag [#allocation4], 1
    %2350 = vsyncpa %s2349, 1

</llo_original>
